<compile_context>
chip_gen: v6e
topology: v6e:2x2x1
jax: 0.10.0
libtpu: 0.0.40
codegen_flags: <defaults>
</compile_context>

<pallas_src>
import math

import jax
import jax.numpy as jnp
from jax.experimental import pallas as pl
from jax.experimental.pallas import tpu as pltpu


_HIDDEN = 1024


# ---------------------------------------------------------------------------
# Kernel
# ---------------------------------------------------------------------------
def _generator_kernel(z_ref, w1_ref, b1_ref, w2_ref, b2_ref, o_ref):
    # hidden = relu(z @ W1 + b1)   (bf16 MXU inputs, f32 accumulation)
    zb = z_ref[...].astype(jnp.bfloat16)
    h = jnp.dot(zb, w1_ref[...], preferred_element_type=jnp.float32)
    h = jnp.maximum(h + b1_ref[...], 0.0)            # (Bp, 1024) + (1, 1024)

    # out_tile = tanh(hidden @ W2_tile + b2_tile)
    o = jnp.dot(h.astype(jnp.bfloat16), w2_ref[...],
                preferred_element_type=jnp.float32)  # (Bp, TN)
    o = o + b2_ref[...]                              # (Bp, TN) + (1, TN)
    o_ref[...] = jnp.tanh(o).astype(o_ref.dtype)


# ---------------------------------------------------------------------------
# Tiling plan + one-time weight packing
# ---------------------------------------------------------------------------
def _plan_tiles(flat):
    """Return (flat_pad, tn, grid_n).

    flat_pad: flat rounded up to a multiple of 128 (lane-dense output).
    tn:       W2 column-tile width, <= 4096 (v7x VMEM-safe).
    grid_n:   number of grid steps; even grid counts preferred (v7x megacore).
    """
    flat_pad = ((flat + 127) // 128) * 128
    cands = [tn for tn in (4096, 2048, 1024, 512, 256, 128) if flat_pad % tn == 0]

    def grid(tn):
        return flat_pad // tn

    even = [tn for tn in cands if grid(tn) >= 2 and grid(tn) % 2 == 0]
    multi = [tn for tn in cands if grid(tn) >= 2]
    if even:
        tn = max(even)
    elif multi:
        tn = max(multi)
    else:
        tn = max(cands)
    return flat_pad, tn, flat_pad // tn


def pack_generator_weights(w2, b2, output_shape):
    """One-time relayout of W2/b2 into contiguous per-tile HBM blocks.

    w2: (1024, flat) bf16 -> (grid_n, 1024, tn)
    b2: (1, flat)   f32  -> (grid_n, 1,    tn)
    Columns are zero-padded up to flat_pad (a multiple of 128).
    """
    flat = int(math.prod(output_shape))
    flat_pad, tn, grid_n = _plan_tiles(flat)
    if flat_pad != flat:
        w2 = jnp.pad(w2, ((0, 0), (0, flat_pad - flat)))
        b2 = jnp.pad(b2, ((0, 0), (0, flat_pad - flat)))
    w2t = w2.reshape(_HIDDEN, grid_n, tn).transpose(1, 0, 2)   # (g, 1024, tn)
    b2t = b2.reshape(1, grid_n, tn).transpose(1, 0, 2)         # (g, 1,    tn)
    return w2t, b2t


# ---------------------------------------------------------------------------
# Wrapper
# ---------------------------------------------------------------------------
def generator_forward(z, w1, b1, w2t, b2t, output_shape):
    """Fused MLP forward (Linear->ReLU->Linear->Tanh) in one Pallas kernel.

    z:   (B, latent_dim) float32
    w1:  (latent_dim, 1024) bfloat16
    b1:  (1, 1024) float32
    w2t: (grid_n, 1024, tn) bfloat16   -- from pack_generator_weights
    b2t: (grid_n, 1, tn) float32       -- from pack_generator_weights
    returns (B, *output_shape) float32
    """
    B, latent_dim = z.shape
    flat = int(math.prod(output_shape))
    flat_pad, tn, grid_n = _plan_tiles(flat)
    assert w2t.shape == (grid_n, _HIDDEN, tn), (w2t.shape, (grid_n, _HIDDEN, tn))
    assert b2t.shape == (grid_n, 1, tn)

    # Pad batch to a multiple of 8 sublanes (unmasked stores, full vreg rows).
    b_pad = max(8, ((B + 7) // 8) * 8)
    if b_pad != B:
        z = jnp.pad(z, ((0, b_pad - B), (0, 0)))

    cost = pl.CostEstimate(
        flops=2 * b_pad * (latent_dim * _HIDDEN + _HIDDEN * flat_pad),
        transcendentals=b_pad * flat_pad,
        bytes_accessed=(z.size * 4 + w1.size * 2 + b1.size * 4
                        + w2t.size * 2 + b2t.size * 4 + b_pad * flat_pad * 4),
    )

    out = pl.pallas_call(
        _generator_kernel,
        out_shape=jax.ShapeDtypeStruct((b_pad, flat_pad), jnp.float32),
        grid_spec=pl.GridSpec(
            grid=(grid_n,),
            in_specs=[
                pl.BlockSpec((b_pad, latent_dim), lambda j: (0, 0)),    # z (resident)
                pl.BlockSpec((latent_dim, _HIDDEN), lambda j: (0, 0)),  # W1 (resident)
                pl.BlockSpec((1, _HIDDEN), lambda j: (0, 0)),           # b1 (resident)
                # Pre-tiled W2/b2: contiguous per-step HBM block, leading dim squeezed.
                pl.BlockSpec((None, _HIDDEN, tn), lambda j: (j, 0, 0)),  # W2 tile
                pl.BlockSpec((None, 1, tn), lambda j: (j, 0, 0)),        # b2 tile
            ],
            out_specs=pl.BlockSpec((b_pad, tn), lambda j: (0, j)),
        ),
        compiler_params=pltpu.CompilerParams(
            dimension_semantics=("parallel",),      # megacore-shard column tiles on v7x
            vmem_limit_bytes=40 * 1024 * 1024,      # 2x8 MiB W2 bufs + residents, v7x-safe
        ),
        cost_estimate=cost,
    )(z, w1, b1, w2t, b2t)

    return out[:B, :flat].reshape((B,) + tuple(output_shape))


# ---------------------------------------------------------------------------
# Parameter init (nn.Linear-style U(-1/sqrt(fan_in), 1/sqrt(fan_in)))
# ---------------------------------------------------------------------------
def init_generator_params(key, latent_dim, output_shape):
    """Weights stored in bfloat16 (streamed dtype); biases stay float32."""
    flat = int(math.prod(output_shape))
    k1, k2, k3, k4 = jax.random.split(key, 4)

    bound1 = 1.0 / math.sqrt(latent_dim)
    w1 = jax.random.uniform(k1, (latent_dim, _HIDDEN), jnp.float32,
                            -bound1, bound1).astype(jnp.bfloat16)
    b1 = jax.random.uniform(k2, (1, _HIDDEN), jnp.float32, -bound1, bound1)

    bound2 = 1.0 / math.sqrt(_HIDDEN)
    w2 = jax.random.uniform(k3, (_HIDDEN, flat), jnp.float32,
                            -bound2, bound2).astype(jnp.bfloat16)
    b2 = jax.random.uniform(k4, (1, flat), jnp.float32, -bound2, bound2)
    return w1, b1, w2, b2


# ---------------------------------------------------------------------------
# Self-test
# ---------------------------------------------------------------------------
def _run_case(key, latent_dim, output_shape, batch):
    k_params, k_z = jax.random.split(key)
    w1, b1, w2, b2 = init_generator_params(k_params, latent_dim, output_shape)
    w2t, b2t = pack_generator_weights(w2, b2, output_shape)   # one-time relayout
    z = jax.random.normal(k_z, (batch, latent_dim), jnp.float32)

    out = generator_forward(z, w1, b1, w2t, b2t, output_shape)
    out = jax.block_until_ready(out)

    # Reference in plain JAX using the same (bf16-weight) parameters.
    h_ref = jnp.maximum(
        jnp.dot(z.astype(jnp.bfloat16), w1, preferred_element_type=jnp.float32) + b1,
        0.0)
    ref = jnp.tanh(
        jnp.dot(h_ref.astype(jnp.bfloat16), w2, preferred_element_type=jnp.float32) + b2
    ).reshape((batch,) + tuple(output_shape))

    assert out.shape == (batch,) + tuple(output_shape)
    err = float(jnp.max(jnp.abs(out - ref)))
    assert err < 1e-3, f"max abs err {err} for output_shape={output_shape}"


if __name__ == "__main__":
    latent_dim = 32
    batch = 2
    key = jax.random.PRNGKey(0)
    k_a, k_b = jax.random.split(key)

    # Case 1: flat = 1024 (128-divisible) -> TN=512, grid=(2,).
    _run_case(k_a, latent_dim, (4, 16, 16), batch)
    # Case 2: flat = 392 (NOT 128-divisible) -> padded to 512 -> TN=256, grid=(2,).
    _run_case(k_b, latent_dim, (2, 14, 14), batch)

    print("KERNEL_OK")
</pallas_src>

<mosaic_0001>
module attributes {stable_mosaic.version = 11 : i64} {
  func.func @_generator_kernel(%arg0: i32, %arg1: memref<8x32xf32, #tpu.memory_space<vmem>>, %arg2: memref<32x1024xbf16, #tpu.memory_space<vmem>>, %arg3: memref<1x1024xf32, #tpu.memory_space<vmem>>, %arg4: memref<1x1024x512xbf16, #tpu.memory_space<vmem>>, %arg5: memref<1x1x512xf32, #tpu.memory_space<vmem>>, %arg6: memref<8x512xf32, #tpu.memory_space<vmem>>) attributes {dimension_semantics = [#tpu.dimension_semantics<parallel>], iteration_bounds = array<i64: 2>, scalar_prefetch = 0 : i64, scratch_operands = 0 : i64, tpu.core_type = #tpu.core_type<tc>, window_params = [{pipeline_mode = #tpu.pipeline_mode<synchronous>, transform_indices = @transform_0, window_bounds = array<i64: 8, 32>}, {pipeline_mode = #tpu.pipeline_mode<synchronous>, transform_indices = @transform_1, window_bounds = array<i64: 32, 1024>}, {pipeline_mode = #tpu.pipeline_mode<synchronous>, transform_indices = @transform_2, window_bounds = array<i64: 1, 1024>}, {transform_indices = @transform_3, window_bounds = array<i64: 1, 1024, 512>}, {transform_indices = @transform_4, window_bounds = array<i64: 1, 1, 512>}, {transform_indices = @transform_5, window_bounds = array<i64: 8, 512>}]} {
    %c0 = arith.constant 0 : index
    %c0_0 = arith.constant 0 : index
    %0 = vector.load %arg1[%c0, %c0_0] : memref<8x32xf32, #tpu.memory_space<vmem>>, vector<8x32xf32>
    %1 = arith.truncf %0 : vector<8x32xf32> to vector<8x32xbf16>
    %c0_1 = arith.constant 0 : index
    %c0_2 = arith.constant 0 : index
    %2 = vector.load %arg2[%c0_1, %c0_2] : memref<32x1024xbf16, #tpu.memory_space<vmem>>, vector<32x1024xbf16>
    %cst = arith.constant dense<0.000000e+00> : vector<8x1024xf32>
    %3 = tpu.matmul %1, %2, %cst {dimension_numbers = #tpu.dot_dimension_numbers<[1], [0], [0], [1], [0, 0, 1, 1], [], []>} : vector<8x32xbf16>, vector<32x1024xbf16>, vector<8x1024xf32> -> vector<8x1024xf32>
    %c0_3 = arith.constant 0 : index
    %c0_4 = arith.constant 0 : index
    %4 = vector.load %arg3[%c0_3, %c0_4] : memref<1x1024xf32, #tpu.memory_space<vmem>>, vector<1x1024xf32>
    %5 = vector.broadcast %4 : vector<1x1024xf32> to vector<8x1024xf32>
    %6 = arith.addf %3, %5 : vector<8x1024xf32>
    %cst_5 = arith.constant 0.000000e+00 : f32
    %7 = vector.broadcast %cst_5 : f32 to vector<8x1024xf32>
    %8 = arith.maximumf %6, %7 : vector<8x1024xf32>
    %9 = arith.truncf %8 : vector<8x1024xf32> to vector<8x1024xbf16>
    %c0_6 = arith.constant 0 : index
    %c0_7 = arith.constant 0 : index
    %c0_8 = arith.constant 0 : index
    %10 = vector.load %arg4[%c0_6, %c0_7, %c0_8] : memref<1x1024x512xbf16, #tpu.memory_space<vmem>>, vector<1x1024x512xbf16>
    %11 = vector.shape_cast %10 : vector<1x1024x512xbf16> to vector<1024x512xbf16>
    %cst_9 = arith.constant dense<0.000000e+00> : vector<8x512xf32>
    %12 = tpu.matmul %9, %11, %cst_9 {dimension_numbers = #tpu.dot_dimension_numbers<[1], [0], [0], [1], [0, 0, 1, 1], [], []>} : vector<8x1024xbf16>, vector<1024x512xbf16>, vector<8x512xf32> -> vector<8x512xf32>
    %c0_10 = arith.constant 0 : index
    %c0_11 = arith.constant 0 : index
    %c0_12 = arith.constant 0 : index
    %13 = vector.load %arg5[%c0_10, %c0_11, %c0_12] : memref<1x1x512xf32, #tpu.memory_space<vmem>>, vector<1x1x512xf32>
    %14 = vector.shape_cast %13 : vector<1x1x512xf32> to vector<1x512xf32>
    %15 = vector.broadcast %14 : vector<1x512xf32> to vector<8x512xf32>
    %16 = arith.addf %12, %15 : vector<8x512xf32>
    %17 = math.tanh %16 : vector<8x512xf32>
    %c0_13 = arith.constant 0 : index
    %c0_14 = arith.constant 0 : index
    %18 = vector.load %arg6[%c0_13, %c0_14] : memref<8x512xf32, #tpu.memory_space<vmem>>, vector<8x512xf32>
    tpu.vector_store %arg6[%c0_13, %c0_14], %17 {strides = array<i32>} : memref<8x512xf32, #tpu.memory_space<vmem>>, vector<8x512xf32>,
    return
  }
  func.func @transform_0(%arg0: i32) -> (i32, i32) {
    %c0_i32 = arith.constant 0 : i32
    %c0_i32_0 = arith.constant 0 : i32
    %c0_i32_1 = arith.constant 0 : i32
    return %c0_i32, %c0_i32_0 : i32, i32
  }
  func.func @transform_1(%arg0: i32) -> (i32, i32) {
    %c0_i32 = arith.constant 0 : i32
    %c0_i32_0 = arith.constant 0 : i32
    %c0_i32_1 = arith.constant 0 : i32
    return %c0_i32, %c0_i32_0 : i32, i32
  }
  func.func @transform_2(%arg0: i32) -> (i32, i32) {
    %c0_i32 = arith.constant 0 : i32
    %c0_i32_0 = arith.constant 0 : i32
    %c0_i32_1 = arith.constant 0 : i32
    return %c0_i32, %c0_i32_0 : i32, i32
  }
  func.func @transform_3(%arg0: i32) -> (i32, i32, i32) {
    %c0_i32 = arith.constant 0 : i32
    %c0_i32_0 = arith.constant 0 : i32
    %c0_i32_1 = arith.constant 0 : i32
    return %arg0, %c0_i32, %c0_i32_0 : i32, i32, i32
  }
  func.func @transform_4(%arg0: i32) -> (i32, i32, i32) {
    %c0_i32 = arith.constant 0 : i32
    %c0_i32_0 = arith.constant 0 : i32
    %c0_i32_1 = arith.constant 0 : i32
    return %arg0, %c0_i32, %c0_i32_0 : i32, i32, i32
  }
  func.func @transform_5(%arg0: i32) -> (i32, i32) {
    %c0_i32 = arith.constant 0 : i32
    %c0_i32_0 = arith.constant 0 : i32
    return %c0_i32, %arg0 : i32, i32
  }
}

</mosaic_0001>

<llo_original>
// kernel: tpu_custom_call.1
$region0: #{tpu_custom_call.1}
  #allocation0 [shape = 'u32[]', space=smem, size = 0x4, offset = 0x4, fixed_abs, tag = 'smem constant byte address 0x4 - core index']
  #allocation1 [shape = 'u32[144,128]{1,0:T(1,128)}', space=vmem, size = 0x12000, scoped, tag = 'internal scratch']
  %s0 = inlined_call_operand.hbm [shape: f32[8,32], index: 0, kind: input, shape index: {}]
  %s1 = inlined_call_operand.hbm [shape: bf16[32,1024], index: 1, kind: input, shape index: {}]
  %s2 = inlined_call_operand.hbm [shape: f32[1,1024], index: 2, kind: input, shape index: {}]
  %s3 = inlined_call_operand.hbm [shape: bf16[2,1024,512], index: 3, kind: input, shape index: {}]
  %s4 = inlined_call_operand.hbm [shape: f32[2,1,512], index: 4, kind: input, shape index: {}]
  %s5 = inlined_call_operand.hbm [shape: f32[8,1024], index: 5, kind: output, shape index: {}]
  %s6 = sld [smem:[#allocation0]]
  $region73: #{tpu_custom_call.1} parent=0
    _
  %s8 = ssub.s32 1, %s6
  %s9 = scalar_select 0, %s8, %s6
  $region1: #{tpu_custom_call.1} parent=0
    #allocation2 [shape = 'u8[4096]{0}', space=vmem, size = 0x1000, scoped, tag = 'input window, operand 0, single buffered']
    #allocation3 [shape = 's32[2]{0}', space=sflag, size = 0x8, scoped, tag = 'scoped memory for tpu_custom_call.1']
    #allocation4 [shape = 's32[2]{0}', space=sflag, size = 0x8, scoped, tag = 'scoped memory for tpu_custom_call.1']
    #allocation5 [shape = 'u8[65536]{0}', space=vmem, size = 0x10000, scoped, tag = 'input window, operand 1, single buffered']
    #allocation6 [shape = 's32[1]{0}', space=sflag, size = 0x4, scoped, tag = 'scoped memory for tpu_custom_call.1']
    #allocation7 [shape = 'u8[4096]{0}', space=vmem, size = 0x1000, scoped, tag = 'input window, operand 2, single buffered']
    #allocation8 [shape = 'u8[2097152]{0}', space=vmem, size = 0x200000, scoped, tag = 'input window, operand 3']
    #allocation9 [shape = 's32[2]{0}', space=sflag, size = 0x8, scoped, tag = 'scoped memory for tpu_custom_call.1']
    #allocation10 [shape = 'u8[4096]{0}', space=vmem, size = 0x1000, scoped, tag = 'input window, operand 4']
    #allocation11 [shape = 'u8[32768]{0}', space=vmem, size = 0x8000, scoped, tag = 'output window, operand 0']
    %10 = vsyncpa [#allocation3], 0
    %11 = vsyncpa [#allocation6], 0
    %12 = vsyncpa [#allocation9], 0
    %s13 = scalar_lea.sflag [#allocation9], 1
    %14 = vsyncpa %s13, 0
    %15 = vsyncpa [#allocation4], 0
    %s16 = scalar_lea.sflag [#allocation4], 1
    %17 = vsyncpa %s16, 0
    loop: start=0, step=1, limit=4
    $region2: #{tpu_custom_call.1} parent=1 // loop_pre_header
      _
    $region3: #{tpu_custom_call.1} parent=1 // loop_header
      %s19 = sphi 0, %s23
      %p20 = scmp.ge.s32.totalorder %s19, 4
      %s27 = sphi 0, %s27
      %s29 = sphi 0, %s27
      %s30 = sphi 0, %s29
      %s44 = sphi 0, %s30
      %s48 = sphi 0, %s48
      %s50 = sphi 0, %s48
      %s51 = sphi 0, %s50
      %s65 = sphi 0, %s51
      %s69 = sphi 0, %s69
      %s71 = sphi 0, %s69
      %s72 = sphi 0, %s71
      %s86 = sphi 0, %s72
      %s92 = sphi 0, %s94
      %s95 = sphi 0, %s92
      %s96 = sphi 0, %s95
      %s112 = sphi 0, %s96
      %s118 = sphi 0, %s120
      %s121 = sphi 0, %s118
      %s122 = sphi 0, %s121
      %s138 = sphi 0, %s122
      %s144 = sphi 0, %s146
      %s147 = sphi 0, %s144
      %s148 = sphi 0, %s147
      %s164 = sphi 0, %s148
    $region4: #{tpu_custom_call.1} parent=1 // loop_header_branch
      %22 = sbr.rel (%p20) target = $region8
    $region5: #{tpu_custom_call.1} parent=1 // loop_body
      %s24 = ssub.s32 %s19, 1
      %s25 = ssub.s32 %s19, 2
      %s26 = sadd.s32 %s19, 1
      %s28 = sadd.s32 %s27, 1
      %p31 = scmp.eq.s32.totalorder %s19, 1
      %p32 = scmp.ne.s32.totalorder %s27, %s29
      %p33 = scmp.eq.s32.totalorder %s19, 0
      %p34 = por %p32, %p33
      %p35 = scmp.ne.s32.totalorder %s27, %s29
      %p36 = scmp.eq.s32.totalorder %s24, 1
      %p37 = por %p35, %p36
      %p38 = scmp.ne.s32.totalorder %s29, %s30
      %p39 = scmp.eq.s32.totalorder %s24, 0
      %p40 = por %p38, %p39
      %p41 = scmp.ne.s32.totalorder %s29, %s30
      %p42 = scmp.eq.s32.totalorder %s25, 1
      %p43 = por %p41, %p42
      %p45 = scmp.ne.s32.totalorder %s30, %s44
      %p46 = scmp.eq.s32.totalorder %s25, 0
      %p47 = por %p45, %p46
      %s49 = sadd.s32 %s48, 1
      %p52 = scmp.eq.s32.totalorder %s19, 1
      %p53 = scmp.ne.s32.totalorder %s48, %s50
      %p54 = scmp.eq.s32.totalorder %s19, 0
      %p55 = por %p53, %p54
      %p56 = scmp.ne.s32.totalorder %s48, %s50
      %p57 = scmp.eq.s32.totalorder %s24, 1
      %p58 = por %p56, %p57
      %p59 = scmp.ne.s32.totalorder %s50, %s51
      %p60 = scmp.eq.s32.totalorder %s24, 0
      %p61 = por %p59, %p60
      %p62 = scmp.ne.s32.totalorder %s50, %s51
      %p63 = scmp.eq.s32.totalorder %s25, 1
      %p64 = por %p62, %p63
      %p66 = scmp.ne.s32.totalorder %s51, %s65
      %p67 = scmp.eq.s32.totalorder %s25, 0
      %p68 = por %p66, %p67
      %s70 = sadd.s32 %s69, 1
      %p73 = scmp.eq.s32.totalorder %s19, 1
      %p74 = scmp.ne.s32.totalorder %s69, %s71
      %p75 = scmp.eq.s32.totalorder %s19, 0
      %p76 = por %p74, %p75
      %p77 = scmp.ne.s32.totalorder %s69, %s71
      %p78 = scmp.eq.s32.totalorder %s24, 1
      %p79 = por %p77, %p78
      %p80 = scmp.ne.s32.totalorder %s71, %s72
      %p81 = scmp.eq.s32.totalorder %s24, 0
      %p82 = por %p80, %p81
      %p83 = scmp.ne.s32.totalorder %s71, %s72
      %p84 = scmp.eq.s32.totalorder %s25, 1
      %p85 = por %p83, %p84
      %p87 = scmp.ne.s32.totalorder %s72, %s86
      %p88 = scmp.eq.s32.totalorder %s25, 0
      %p89 = por %p87, %p88
      %s90 = ssub.s32 %s19, %s26
      %p91 = scmp.eq.s32.totalorder %s90, 0
      %s93 = sadd.s32 %s92, 1
      %s94 = scalar_select %p91, %s92, %s93
      %p97 = pneg %p91
      %p98 = scmp.eq.s32.totalorder %s19, 1
      %p99 = por %p97, %p98
      %p100 = scmp.ne.s32.totalorder %s92, %s95
      %p101 = scmp.eq.s32.totalorder %s19, 0
      %p102 = por %p100, %p101
      %p103 = scmp.ne.s32.totalorder %s92, %s95
      %p104 = scmp.eq.s32.totalorder %s24, 1
      %p105 = por %p103, %p104
      %p106 = scmp.ne.s32.totalorder %s95, %s96
      %p107 = scmp.eq.s32.totalorder %s24, 0
      %p108 = por %p106, %p107
      %p109 = scmp.ne.s32.totalorder %s95, %s96
      %p110 = scmp.eq.s32.totalorder %s25, 1
      %p111 = por %p109, %p110
      %p113 = scmp.ne.s32.totalorder %s96, %s112
      %p114 = scmp.eq.s32.totalorder %s25, 0
      %p115 = por %p113, %p114
      %s116 = ssub.s32 %s19, %s26
      %p117 = scmp.eq.s32.totalorder %s116, 0
      %s119 = sadd.s32 %s118, 1
      %s120 = scalar_select %p117, %s118, %s119
      %p123 = pneg %p117
      %p124 = scmp.eq.s32.totalorder %s19, 1
      %p125 = por %p123, %p124
      %p126 = scmp.ne.s32.totalorder %s118, %s121
      %p127 = scmp.eq.s32.totalorder %s19, 0
      %p128 = por %p126, %p127
      %p129 = scmp.ne.s32.totalorder %s118, %s121
      %p130 = scmp.eq.s32.totalorder %s24, 1
      %p131 = por %p129, %p130
      %p132 = scmp.ne.s32.totalorder %s121, %s122
      %p133 = scmp.eq.s32.totalorder %s24, 0
      %p134 = por %p132, %p133
      %p135 = scmp.ne.s32.totalorder %s121, %s122
      %p136 = scmp.eq.s32.totalorder %s25, 1
      %p137 = por %p135, %p136
      %p139 = scmp.ne.s32.totalorder %s122, %s138
      %p140 = scmp.eq.s32.totalorder %s25, 0
      %p141 = por %p139, %p140
      %s142 = ssub.s32 %s19, %s26
      %p143 = scmp.eq.s32.totalorder %s142, 0
      %s145 = sadd.s32 %s144, 1
      %s146 = scalar_select %p143, %s144, %s145
      %p149 = pneg %p143
      %p150 = scmp.eq.s32.totalorder %s19, 1
      %p151 = por %p149, %p150
      %p152 = scmp.ne.s32.totalorder %s144, %s147
      %p153 = scmp.eq.s32.totalorder %s19, 0
      %p154 = por %p152, %p153
      %p155 = scmp.ne.s32.totalorder %s144, %s147
      %p156 = scmp.eq.s32.totalorder %s24, 1
      %p157 = por %p155, %p156
      %p158 = scmp.ne.s32.totalorder %s147, %s148
      %p159 = scmp.eq.s32.totalorder %s24, 0
      %p160 = por %p158, %p159
      %p161 = scmp.ne.s32.totalorder %s147, %s148
      %p162 = scmp.eq.s32.totalorder %s25, 1
      %p163 = por %p161, %p162
      %p165 = scmp.ne.s32.totalorder %s148, %s164
      %p166 = scmp.eq.s32.totalorder %s25, 0
      %p167 = por %p165, %p166
      %p168 = scmp.le.s32.totalorder 1, %s19
      %p169 = scmp.lt.s32.totalorder %s19, 3
      %p170 = pnand %p168, %p169
      %p171 = pneg %p170
      // Predicated region
      $region9: #{tpu_custom_call.1} parent=5 // pred_check
        _
      $region10: #{tpu_custom_call.1} parent=5 // pred_check_branch
        %173 = sbr.rel (%p170) target = $region12
      $region11: #{tpu_custom_call.1} parent=5 // pred_region
        %s174 = ssub.s32 %s19, 1
        // Predicated region
        $region13: #{tpu_custom_call.1} parent=11 // pred_check
          %p175 = pneg %p40
        $region14: #{tpu_custom_call.1} parent=11 // pred_check_branch
          %177 = sbr.rel (%p175) target = $region16
        $region15: #{tpu_custom_call.1} parent=11 // pred_region
          %s179 = ssub.s32 128, 128
          %180 = vsyncadd [#allocation3], %s179
          %s182 = sshll.u32 [#allocation2], 4
          %s183 = int_to_ptr.vmem [resolvable:$true] %s182
          %185 = dma.hbm_to_vmem [thread:$0]  %s0, 128, %s183, [#allocation3]
        $region16: #{tpu_custom_call.1} parent=11 // pred_fallthru
          _
        // Predicated region
        $region17: #{tpu_custom_call.1} parent=11 // pred_check
          %p186 = pneg %p61
        $region18: #{tpu_custom_call.1} parent=11 // pred_check_branch
          %188 = sbr.rel (%p186) target = $region20
        $region19: #{tpu_custom_call.1} parent=11 // pred_region
          %s190 = ssub.s32 2048, 2048
          %191 = vsyncadd [#allocation6], %s190
          %s192 = sshll.u32 [#allocation5], 4
          %s193 = int_to_ptr.vmem [resolvable:$true] %s192
          %198 = dma.hbm_to_vmem [thread:$0]  %s1, 2048, %s193, [#allocation6], 512, 512, 32
        $region20: #{tpu_custom_call.1} parent=11 // pred_fallthru
          _
        // Predicated region
        $region21: #{tpu_custom_call.1} parent=11 // pred_check
          %p199 = pneg %p82
        $region22: #{tpu_custom_call.1} parent=11 // pred_check_branch
          %201 = sbr.rel (%p199) target = $region24
        $region23: #{tpu_custom_call.1} parent=11 // pred_region
          %s203 = ssub.s32 128, 128
          %204 = vsyncadd [#allocation6], %s203
          %s206 = sshll.u32 [#allocation7], 4
          %s207 = int_to_ptr.vmem [resolvable:$true] %s206
          %209 = dma.hbm_to_vmem [thread:$0]  %s2, 128, %s207, [#allocation6]
        $region24: #{tpu_custom_call.1} parent=11 // pred_fallthru
          _
      $region12: #{tpu_custom_call.1} parent=5 // pred_fallthru
        _
      %p210 = scmp.lt.s32.totalorder %s19, 2
      // Predicated region
      $region25: #{tpu_custom_call.1} parent=5 // pred_check
        %p211 = pneg %p210
      $region26: #{tpu_custom_call.1} parent=5 // pred_check_branch
        %213 = sbr.rel (%p211) target = $region28
      $region27: #{tpu_custom_call.1} parent=5 // pred_region
        // Predicated region
        $region29: #{tpu_custom_call.1} parent=27 // pred_check
          %p214 = pneg %p102
        $region30: #{tpu_custom_call.1} parent=27 // pred_check_branch
          %216 = sbr.rel (%p214) target = $region32
        $region31: #{tpu_custom_call.1} parent=27 // pred_region
          %s217 = sand.u32 %s19, 1
          %s218 = scalar_lea.sflag [#allocation9], %s217
          %s219 = sand.u32 %s92, 1
          %s220 = smul.addr %s219, 2048
          %s221 = scalar_lea.vmem [#allocation8], %s220
          %s223 = ssub.s32 32768, 32768
          %224 = vsyncadd %s218, %s223
          %s225 = smul.addr %s19, 512
          %s226 = smul.addr %s225, 64
          %s227 = scalar_lea.hbm %s3, %s226
          %s228 = sshll.u32 %s221, 4
          %s229 = int_to_ptr.vmem [resolvable:$true] %s228
          %234 = dma.hbm_to_vmem [thread:$0]  %s227, 32768, %s229, %s218, 256, 256, 16
        $region32: #{tpu_custom_call.1} parent=27 // pred_fallthru
          _
        // Predicated region
        $region33: #{tpu_custom_call.1} parent=27 // pred_check
          %p235 = pneg %p128
        $region34: #{tpu_custom_call.1} parent=27 // pred_check_branch
          %237 = sbr.rel (%p235) target = $region36
        $region35: #{tpu_custom_call.1} parent=27 // pred_region
          %s238 = sand.u32 %s19, 1
          %s239 = scalar_lea.sflag [#allocation9], %s238
          %s240 = sand.u32 %s118, 1
          %s241 = smul.addr %s240, 4
          %s242 = scalar_lea.vmem [#allocation10], %s241
          %s244 = ssub.s32 64, 64
          %245 = vsyncadd %s239, %s244
          %s246 = smul.addr %s19, 4
          %s247 = smul.addr %s246, 16
          %s248 = scalar_lea.hbm %s4, %s247
          %s250 = sshll.u32 %s242, 4
          %s251 = int_to_ptr.vmem [resolvable:$true] %s250
          %253 = dma.hbm_to_vmem [thread:$0]  %s248, 64, %s251, %s239
        $region36: #{tpu_custom_call.1} parent=27 // pred_fallthru
          _
      $region28: #{tpu_custom_call.1} parent=5 // pred_fallthru
        _
      %p254 = scmp.le.s32.totalorder 1, %s19
      %p255 = scmp.lt.s32.totalorder %s19, 3
      %p256 = pnand %p254, %p255
      %p257 = pneg %p256
      // Predicated region
      $region37: #{tpu_custom_call.1} parent=5 // pred_check
        _
      $region38: #{tpu_custom_call.1} parent=5 // pred_check_branch
        %259 = sbr.rel (%p256) target = $region40
      $region39: #{tpu_custom_call.1} parent=5 // pred_region
        %s260 = ssub.s32 %s19, 1
        // Predicated region
        $region41: #{tpu_custom_call.1} parent=39 // pred_check
          %p261 = pneg %p40
        $region42: #{tpu_custom_call.1} parent=39 // pred_check_branch
          %263 = sbr.rel (%p261) target = $region44
        $region43: #{tpu_custom_call.1} parent=39 // pred_region
          %264 = dma.done [#allocation3], 128
        $region44: #{tpu_custom_call.1} parent=39 // pred_fallthru
          _
        // Predicated region
        $region45: #{tpu_custom_call.1} parent=39 // pred_check
          %p265 = pneg %p61
        $region46: #{tpu_custom_call.1} parent=39 // pred_check_branch
          %267 = sbr.rel (%p265) target = $region48
        $region47: #{tpu_custom_call.1} parent=39 // pred_region
          %268 = dma.done [#allocation6], 2048
        $region48: #{tpu_custom_call.1} parent=39 // pred_fallthru
          _
        // Predicated region
        $region49: #{tpu_custom_call.1} parent=39 // pred_check
          %p269 = pneg %p82
        $region50: #{tpu_custom_call.1} parent=39 // pred_check_branch
          %271 = sbr.rel (%p269) target = $region52
        $region51: #{tpu_custom_call.1} parent=39 // pred_region
          %272 = dma.done [#allocation6], 128
        $region52: #{tpu_custom_call.1} parent=39 // pred_fallthru
          _
        %s273 = sand.u32 %s24, 1
        %s274 = scalar_lea.sflag [#allocation9], %s273
        %s275 = sand.u32 %s95, 1
        %s276 = smul.addr %s275, 2048
        %s277 = scalar_lea.vmem [#allocation8], %s276
        // Predicated region
        $region53: #{tpu_custom_call.1} parent=39 // pred_check
          %p278 = pneg %p108
        $region54: #{tpu_custom_call.1} parent=39 // pred_check_branch
          %280 = sbr.rel (%p278) target = $region56
        $region55: #{tpu_custom_call.1} parent=39 // pred_region
          %281 = dma.done %s274, 32768
        $region56: #{tpu_custom_call.1} parent=39 // pred_fallthru
          _
        %s282 = sand.u32 %s24, 1
        %s283 = scalar_lea.sflag [#allocation9], %s282
        %s284 = sand.u32 %s121, 1
        %s285 = smul.addr %s284, 4
        %s286 = scalar_lea.vmem [#allocation10], %s285
        // Predicated region
        $region57: #{tpu_custom_call.1} parent=39 // pred_check
          %p287 = pneg %p134
        $region58: #{tpu_custom_call.1} parent=39 // pred_check_branch
          %289 = sbr.rel (%p287) target = $region60
        $region59: #{tpu_custom_call.1} parent=39 // pred_region
          %290 = dma.done %s283, 64
        $region60: #{tpu_custom_call.1} parent=39 // pred_fallthru
          _
        %p291 = pneg %p40
        %p292 = pneg %p37
        %p293 = pneg %p61
        %p294 = pneg %p58
        %p295 = pneg %p82
        %p296 = pneg %p79
        %s297 = sand.u32 %s24, 1
        %s298 = scalar_lea.sflag [#allocation9], %s297
        %s299 = sand.u32 %s95, 1
        %s300 = smul.addr %s299, 2048
        %s301 = scalar_lea.vmem [#allocation8], %s300
        %p302 = pneg %p108
        %p303 = pneg %p105
        %s304 = sand.u32 %s24, 1
        %s305 = scalar_lea.sflag [#allocation9], %s304
        %s306 = sand.u32 %s121, 1
        %s307 = smul.addr %s306, 4
        %s308 = scalar_lea.vmem [#allocation10], %s307
        %p309 = pneg %p134
        %p310 = pneg %p131
        %p311 = pneg %p160
        %p312 = pneg %p157
        %s313 = sand.u32 %s147, 1
        %s314 = scalar_lea.sflag [#allocation4], %s313
        %s315 = sand.u32 %s147, 1
        %s316 = smul.addr %s315, 32
        %s317 = scalar_lea.vmem [#allocation11], %s316
        %s318 = smul.u32 4, %s24
        %v320 = vld [vmem:[#allocation2] sm:$0xff]
        %v321 = vpack.c.bf16 %v320, %v320
        %v322 = vld [vmem:[#allocation5] sm:$0xff]
        %v323 = vld [vmem:[#allocation5 + $0x8] sm:$0xff]
        %v324 = vld [vmem:[#allocation5 + $0x10] sm:$0xff]
        %v325 = vld [vmem:[#allocation5 + $0x18] sm:$0xff]
        %v326 = vld [vmem:[#allocation5 + $0x20] sm:$0xff]
        %v327 = vld [vmem:[#allocation5 + $0x28] sm:$0xff]
        %v328 = vld [vmem:[#allocation5 + $0x30] sm:$0xff]
        %v329 = vld [vmem:[#allocation5 + $0x38] sm:$0xff]
        %v330 = vld [vmem:[#allocation5 + $0x40] sm:$0xff]
        %v331 = vld [vmem:[#allocation5 + $0x48] sm:$0xff]
        %v332 = vld [vmem:[#allocation5 + $0x50] sm:$0xff]
        %v333 = vld [vmem:[#allocation5 + $0x58] sm:$0xff]
        %v334 = vld [vmem:[#allocation5 + $0x60] sm:$0xff]
        %v335 = vld [vmem:[#allocation5 + $0x68] sm:$0xff]
        %v336 = vld [vmem:[#allocation5 + $0x70] sm:$0xff]
        %v337 = vld [vmem:[#allocation5 + $0x78] sm:$0xff]
        %v338 = vld [vmem:[#allocation7] sm:$0xff]
        %v340 = vlaneseq
        %v341 = vshrl.u32 %v340, 7
        %v342 = vsub.s32 0, %v341
        %v343 = vrot.slane %v338, %v342
        %v344 = vlaneseq
        %v345 = vshrl.u32 %v344, 7
        %v346 = vsub.s32 1, %v345
        %v347 = vrot.slane %v338, %v346
        %v348 = vlaneseq
        %v349 = vshrl.u32 %v348, 7
        %v350 = vsub.s32 2, %v349
        %v351 = vrot.slane %v338, %v350
        %v352 = vlaneseq
        %v353 = vshrl.u32 %v352, 7
        %v354 = vsub.s32 3, %v353
        %v355 = vrot.slane %v338, %v354
        %v356 = vlaneseq
        %v357 = vshrl.u32 %v356, 7
        %v358 = vsub.s32 4, %v357
        %v359 = vrot.slane %v338, %v358
        %v360 = vlaneseq
        %v361 = vshrl.u32 %v360, 7
        %v362 = vsub.s32 5, %v361
        %v363 = vrot.slane %v338, %v362
        %v364 = vlaneseq
        %v365 = vshrl.u32 %v364, 7
        %v366 = vsub.s32 6, %v365
        %v367 = vrot.slane %v338, %v366
        %v368 = vlaneseq
        %v369 = vshrl.u32 %v368, 7
        %v370 = vsub.s32 7, %v369
        %v371 = vrot.slane %v338, %v370
        %v396 = vunpack.c.l.b16 %v322
        %v397 = vunpack.c.h.b16 %v322
        %v398 = vunpack.c.l.b16 %v323
        %v399 = vunpack.c.h.b16 %v323
        %v400 = vunpack.c.l.b16 %v324
        %v401 = vunpack.c.h.b16 %v324
        %v402 = vunpack.c.l.b16 %v325
        %v403 = vunpack.c.h.b16 %v325
        %v404 = vunpack.c.l.b16 %v326
        %v405 = vunpack.c.h.b16 %v326
        %v406 = vunpack.c.l.b16 %v327
        %v407 = vunpack.c.h.b16 %v327
        %v408 = vunpack.c.l.b16 %v328
        %v409 = vunpack.c.h.b16 %v328
        %v410 = vunpack.c.l.b16 %v329
        %v411 = vunpack.c.h.b16 %v329
        %v412 = vunpack.c.l.b16 %v330
        %v413 = vunpack.c.h.b16 %v330
        %v414 = vunpack.c.l.b16 %v331
        %v415 = vunpack.c.h.b16 %v331
        %v416 = vunpack.c.l.b16 %v332
        %v417 = vunpack.c.h.b16 %v332
        %v418 = vunpack.c.l.b16 %v333
        %v419 = vunpack.c.h.b16 %v333
        %v420 = vunpack.c.l.b16 %v334
        %v421 = vunpack.c.h.b16 %v334
        %v422 = vunpack.c.l.b16 %v335
        %v423 = vunpack.c.h.b16 %v335
        %v424 = vunpack.c.l.b16 %v336
        %v425 = vunpack.c.h.b16 %v336
        %v426 = vunpack.c.l.b16 %v337
        %v427 = vunpack.c.h.b16 %v337
        %v428 = vpack.c.b16 %v404, %v396
        %v429 = vpack.c.b16 %v405, %v397
        %v430 = vpack.c.b16 %v406, %v398
        %v431 = vpack.c.b16 %v407, %v399
        %v432 = vpack.c.b16 %v408, %v400
        %v433 = vpack.c.b16 %v409, %v401
        %v434 = vpack.c.b16 %v410, %v402
        %v435 = vpack.c.b16 %v411, %v403
        %v436 = vpack.c.b16 %v420, %v412
        %v437 = vpack.c.b16 %v421, %v413
        %v438 = vpack.c.b16 %v422, %v414
        %v439 = vpack.c.b16 %v423, %v415
        %v440 = vpack.c.b16 %v424, %v416
        %v441 = vpack.c.b16 %v425, %v417
        %v442 = vpack.c.b16 %v426, %v418
        %v443 = vpack.c.b16 %v427, %v419
        %vm460 = vcmask 261120
        %v462 = vsel %vm460, %v321, 0
        %464 = vmatprep.subr.bf16.mxu0 0
        %465 = vmatpush1.bf16.msra.mxu0 0
        %466 = vmatprep.subr.bf16.mxu0 0
        %467 = vmatpush1.bf16.msra.mxu0 0
        %468 = vmatprep.subr.bf16.mxu0 0
        %469 = vmatpush1.bf16.msra.mxu0 0
        %470 = vmatprep.subr.bf16.mxu0 0
        %471 = vmatpush1.bf16.msra.mxu0 0
        %472 = vmatprep.subr.bf16.mxu0 0
        %473 = vmatpush1.bf16.msra.mxu0 0
        %474 = vmatprep.subr.bf16.mxu0 0
        %475 = vmatpush1.bf16.msra.mxu0 0
        %476 = vmatprep.subr.bf16.mxu0 %v437
        %477 = vmatpush1.bf16.msra.mxu0 %v436
        %478 = vmatprep.subr.bf16.mxu0 %v429
        %479 = vmatpush1.bf16.msra.mxu0 %v428
        %480 = vmatprep.subr.bf16.mxu0 0
        %481 = vmatpush2.bf16.msra.mxu0 0
        %482 = vmatprep.subr.bf16.mxu0 0
        %483 = vmatpush2.bf16.msra.mxu0 0
        %484 = vmatprep.subr.bf16.mxu0 0
        %485 = vmatpush2.bf16.msra.mxu0 0
        %486 = vmatprep.subr.bf16.mxu0 0
        %487 = vmatpush2.bf16.msra.mxu0 0
        %488 = vmatprep.subr.bf16.mxu0 0
        %489 = vmatpush2.bf16.msra.mxu0 0
        %490 = vmatprep.subr.bf16.mxu0 0
        %491 = vmatpush2.bf16.msra.mxu0 0
        %492 = vmatprep.subr.bf16.mxu0 0
        %493 = vmatpush2.bf16.msra.mxu0 0
        %494 = vmatprep.subr.bf16.mxu0 0
        %495 = vmatpush2.bf16.msra.mxu0 0
        %496 = vmatprep.mubr.bf16.mxu0 0
        %497 = vmatmul.mubr.bf16.gmra.mxu0 %v462
        %v498 = vpop.f32.mrf.mxu0
        %v499 = vadd.f32 %v343, %v498
        %v500 = vpop.f32.mrf.mxu0
        %v501 = vadd.f32 %v347, %v500
        %v502 = vpop.f32.mrf.mxu0
        %v503 = vpop.f32.mrf.mxu0
        %504 = vdwg.mxu0
        %505 = vmatprep.subr.bf16.mxu0 0
        %506 = vmatpush1.bf16.msra.mxu0 0
        %507 = vmatprep.subr.bf16.mxu0 0
        %508 = vmatpush1.bf16.msra.mxu0 0
        %509 = vmatprep.subr.bf16.mxu0 0
        %510 = vmatpush1.bf16.msra.mxu0 0
        %511 = vmatprep.subr.bf16.mxu0 0
        %512 = vmatpush1.bf16.msra.mxu0 0
        %513 = vmatprep.subr.bf16.mxu0 0
        %514 = vmatpush1.bf16.msra.mxu0 0
        %515 = vmatprep.subr.bf16.mxu0 0
        %516 = vmatpush1.bf16.msra.mxu0 0
        %517 = vmatprep.subr.bf16.mxu0 %v439
        %518 = vmatpush1.bf16.msra.mxu0 %v438
        %519 = vmatprep.subr.bf16.mxu0 %v431
        %520 = vmatpush1.bf16.msra.mxu0 %v430
        %521 = vmatprep.subr.bf16.mxu0 0
        %522 = vmatpush2.bf16.msra.mxu0 0
        %523 = vmatprep.subr.bf16.mxu0 0
        %524 = vmatpush2.bf16.msra.mxu0 0
        %525 = vmatprep.subr.bf16.mxu0 0
        %526 = vmatpush2.bf16.msra.mxu0 0
        %527 = vmatprep.subr.bf16.mxu0 0
        %528 = vmatpush2.bf16.msra.mxu0 0
        %529 = vmatprep.subr.bf16.mxu0 0
        %530 = vmatpush2.bf16.msra.mxu0 0
        %531 = vmatprep.subr.bf16.mxu0 0
        %532 = vmatpush2.bf16.msra.mxu0 0
        %533 = vmatprep.subr.bf16.mxu0 0
        %534 = vmatpush2.bf16.msra.mxu0 0
        %535 = vmatprep.subr.bf16.mxu0 0
        %536 = vmatpush2.bf16.msra.mxu0 0
        %537 = vmatprep.mubr.bf16.mxu0 0
        %538 = vmatmul.mubr.bf16.gmra.mxu0 %v462
        %v539 = vpop.f32.mrf.mxu0
        %v540 = vadd.f32 %v351, %v539
        %v541 = vpop.f32.mrf.mxu0
        %v542 = vadd.f32 %v355, %v541
        %v543 = vpop.f32.mrf.mxu0
        %v544 = vpop.f32.mrf.mxu0
        %545 = vdwg.mxu0
        %546 = vmatprep.subr.bf16.mxu0 0
        %547 = vmatpush1.bf16.msra.mxu0 0
        %548 = vmatprep.subr.bf16.mxu0 0
        %549 = vmatpush1.bf16.msra.mxu0 0
        %550 = vmatprep.subr.bf16.mxu0 0
        %551 = vmatpush1.bf16.msra.mxu0 0
        %552 = vmatprep.subr.bf16.mxu0 0
        %553 = vmatpush1.bf16.msra.mxu0 0
        %554 = vmatprep.subr.bf16.mxu0 0
        %555 = vmatpush1.bf16.msra.mxu0 0
        %556 = vmatprep.subr.bf16.mxu0 0
        %557 = vmatpush1.bf16.msra.mxu0 0
        %558 = vmatprep.subr.bf16.mxu0 %v441
        %559 = vmatpush1.bf16.msra.mxu0 %v440
        %560 = vmatprep.subr.bf16.mxu0 %v433
        %561 = vmatpush1.bf16.msra.mxu0 %v432
        %562 = vmatprep.subr.bf16.mxu0 0
        %563 = vmatpush2.bf16.msra.mxu0 0
        %564 = vmatprep.subr.bf16.mxu0 0
        %565 = vmatpush2.bf16.msra.mxu0 0
        %566 = vmatprep.subr.bf16.mxu0 0
        %567 = vmatpush2.bf16.msra.mxu0 0
        %568 = vmatprep.subr.bf16.mxu0 0
        %569 = vmatpush2.bf16.msra.mxu0 0
        %570 = vmatprep.subr.bf16.mxu0 0
        %571 = vmatpush2.bf16.msra.mxu0 0
        %572 = vmatprep.subr.bf16.mxu0 0
        %573 = vmatpush2.bf16.msra.mxu0 0
        %574 = vmatprep.subr.bf16.mxu0 0
        %575 = vmatpush2.bf16.msra.mxu0 0
        %576 = vmatprep.subr.bf16.mxu0 0
        %577 = vmatpush2.bf16.msra.mxu0 0
        %578 = vmatprep.mubr.bf16.mxu0 0
        %579 = vmatmul.mubr.bf16.gmra.mxu0 %v462
        %v580 = vpop.f32.mrf.mxu0
        %v581 = vadd.f32 %v359, %v580
        %v582 = vpop.f32.mrf.mxu0
        %v583 = vadd.f32 %v363, %v582
        %v584 = vpop.f32.mrf.mxu0
        %v585 = vpop.f32.mrf.mxu0
        %586 = vdwg.mxu0
        %587 = vmatprep.subr.bf16.mxu0 0
        %588 = vmatpush1.bf16.msra.mxu0 0
        %589 = vmatprep.subr.bf16.mxu0 0
        %590 = vmatpush1.bf16.msra.mxu0 0
        %591 = vmatprep.subr.bf16.mxu0 0
        %592 = vmatpush1.bf16.msra.mxu0 0
        %593 = vmatprep.subr.bf16.mxu0 0
        %594 = vmatpush1.bf16.msra.mxu0 0
        %595 = vmatprep.subr.bf16.mxu0 0
        %596 = vmatpush1.bf16.msra.mxu0 0
        %597 = vmatprep.subr.bf16.mxu0 0
        %598 = vmatpush1.bf16.msra.mxu0 0
        %599 = vmatprep.subr.bf16.mxu0 %v443
        %600 = vmatpush1.bf16.msra.mxu0 %v442
        %601 = vmatprep.subr.bf16.mxu0 %v435
        %602 = vmatpush1.bf16.msra.mxu0 %v434
        %603 = vmatprep.subr.bf16.mxu0 0
        %604 = vmatpush2.bf16.msra.mxu0 0
        %605 = vmatprep.subr.bf16.mxu0 0
        %606 = vmatpush2.bf16.msra.mxu0 0
        %607 = vmatprep.subr.bf16.mxu0 0
        %608 = vmatpush2.bf16.msra.mxu0 0
        %609 = vmatprep.subr.bf16.mxu0 0
        %610 = vmatpush2.bf16.msra.mxu0 0
        %611 = vmatprep.subr.bf16.mxu0 0
        %612 = vmatpush2.bf16.msra.mxu0 0
        %613 = vmatprep.subr.bf16.mxu0 0
        %614 = vmatpush2.bf16.msra.mxu0 0
        %615 = vmatprep.subr.bf16.mxu0 0
        %616 = vmatpush2.bf16.msra.mxu0 0
        %617 = vmatprep.subr.bf16.mxu0 0
        %618 = vmatpush2.bf16.msra.mxu0 0
        %619 = vmatprep.mubr.bf16.mxu0 0
        %620 = vmatmul.mubr.bf16.gmra.mxu0 %v462
        %v621 = vpop.f32.mrf.mxu0
        %v622 = vadd.f32 %v367, %v621
        %v623 = vpop.f32.mrf.mxu0
        %v624 = vadd.f32 %v371, %v623
        %v625 = vpop.f32.mrf.mxu0
        %v626 = vpop.f32.mrf.mxu0
        %627 = vdwg.mxu0
        %v628 = vmax.f32 %v499, 0.0
        %v629 = vmax.f32 %v501, 0.0
        %v630 = vmax.f32 %v540, 0.0
        %v631 = vmax.f32 %v542, 0.0
        %v632 = vmax.f32 %v581, 0.0
        %v633 = vmax.f32 %v583, 0.0
        %v634 = vmax.f32 %v622, 0.0
        %v635 = vmax.f32 %v624, 0.0
        %v636 = vpack.c.bf16 %v628, %v628
        %v637 = vpack.c.bf16 %v629, %v629
        %v638 = vpack.c.bf16 %v630, %v630
        %v639 = vpack.c.bf16 %v631, %v631
        %v640 = vpack.c.bf16 %v632, %v632
        %v641 = vpack.c.bf16 %v633, %v633
        %v642 = vpack.c.bf16 %v634, %v634
        %v643 = vpack.c.bf16 %v635, %v635
        %v644 = vld [vmem:[%s277] sm:$0xff]
        %v645 = vld [vmem:[%s277 + $0x8] sm:$0xff]
        %v646 = vld [vmem:[%s277 + $0x10] sm:$0xff]
        %v647 = vld [vmem:[%s277 + $0x18] sm:$0xff]
        %v648 = vld [vmem:[%s277 + $0x20] sm:$0xff]
        %v649 = vld [vmem:[%s277 + $0x28] sm:$0xff]
        %v650 = vld [vmem:[%s277 + $0x30] sm:$0xff]
        %v651 = vld [vmem:[%s277 + $0x38] sm:$0xff]
        %v652 = vld [vmem:[%s277 + $0x40] sm:$0xff]
        %v653 = vld [vmem:[%s277 + $0x48] sm:$0xff]
        %v654 = vld [vmem:[%s277 + $0x50] sm:$0xff]
        %v655 = vld [vmem:[%s277 + $0x58] sm:$0xff]
        %v656 = vld [vmem:[%s277 + $0x60] sm:$0xff]
        %v657 = vld [vmem:[%s277 + $0x68] sm:$0xff]
        %v658 = vld [vmem:[%s277 + $0x70] sm:$0xff]
        %v659 = vld [vmem:[%s277 + $0x78] sm:$0xff]
        %v660 = vld [vmem:[%s277 + $0x80] sm:$0xff]
        %v661 = vld [vmem:[%s277 + $0x88] sm:$0xff]
        %v662 = vld [vmem:[%s277 + $0x90] sm:$0xff]
        %v663 = vld [vmem:[%s277 + $0x98] sm:$0xff]
        %v664 = vld [vmem:[%s277 + $0xa0] sm:$0xff]
        %v665 = vld [vmem:[%s277 + $0xa8] sm:$0xff]
        %v666 = vld [vmem:[%s277 + $0xb0] sm:$0xff]
        %v667 = vld [vmem:[%s277 + $0xb8] sm:$0xff]
        %v668 = vld [vmem:[%s277 + $0xc0] sm:$0xff]
        %v669 = vld [vmem:[%s277 + $0xc8] sm:$0xff]
        %v670 = vld [vmem:[%s277 + $0xd0] sm:$0xff]
        %v671 = vld [vmem:[%s277 + $0xd8] sm:$0xff]
        %v672 = vld [vmem:[%s277 + $0xe0] sm:$0xff]
        %v673 = vld [vmem:[%s277 + $0xe8] sm:$0xff]
        %v674 = vld [vmem:[%s277 + $0xf0] sm:$0xff]
        %v675 = vld [vmem:[%s277 + $0xf8] sm:$0xff]
        %v676 = vld [vmem:[%s277 + $0x100] sm:$0xff]
        %v677 = vld [vmem:[%s277 + $0x108] sm:$0xff]
        %v678 = vld [vmem:[%s277 + $0x110] sm:$0xff]
        %v679 = vld [vmem:[%s277 + $0x118] sm:$0xff]
        %v680 = vld [vmem:[%s277 + $0x120] sm:$0xff]
        %v681 = vld [vmem:[%s277 + $0x128] sm:$0xff]
        %v682 = vld [vmem:[%s277 + $0x130] sm:$0xff]
        %v683 = vld [vmem:[%s277 + $0x138] sm:$0xff]
        %v684 = vld [vmem:[%s277 + $0x140] sm:$0xff]
        %v685 = vld [vmem:[%s277 + $0x148] sm:$0xff]
        %v686 = vld [vmem:[%s277 + $0x150] sm:$0xff]
        %v687 = vld [vmem:[%s277 + $0x158] sm:$0xff]
        %v688 = vld [vmem:[%s277 + $0x160] sm:$0xff]
        %v689 = vld [vmem:[%s277 + $0x168] sm:$0xff]
        %v690 = vld [vmem:[%s277 + $0x170] sm:$0xff]
        %v691 = vld [vmem:[%s277 + $0x178] sm:$0xff]
        %v692 = vld [vmem:[%s277 + $0x180] sm:$0xff]
        %v693 = vld [vmem:[%s277 + $0x188] sm:$0xff]
        %v694 = vld [vmem:[%s277 + $0x190] sm:$0xff]
        %v695 = vld [vmem:[%s277 + $0x198] sm:$0xff]
        %v696 = vld [vmem:[%s277 + $0x1a0] sm:$0xff]
        %v697 = vld [vmem:[%s277 + $0x1a8] sm:$0xff]
        %v698 = vld [vmem:[%s277 + $0x1b0] sm:$0xff]
        %v699 = vld [vmem:[%s277 + $0x1b8] sm:$0xff]
        %v700 = vld [vmem:[%s277 + $0x1c0] sm:$0xff]
        %v701 = vld [vmem:[%s277 + $0x1c8] sm:$0xff]
        %v702 = vld [vmem:[%s277 + $0x1d0] sm:$0xff]
        %v703 = vld [vmem:[%s277 + $0x1d8] sm:$0xff]
        %v704 = vld [vmem:[%s277 + $0x1e0] sm:$0xff]
        %v705 = vld [vmem:[%s277 + $0x1e8] sm:$0xff]
        %v706 = vld [vmem:[%s277 + $0x1f0] sm:$0xff]
        %v707 = vld [vmem:[%s277 + $0x1f8] sm:$0xff]
        %v708 = vld [vmem:[%s277 + $0x200] sm:$0xff]
        %v709 = vld [vmem:[%s277 + $0x208] sm:$0xff]
        %v710 = vld [vmem:[%s277 + $0x210] sm:$0xff]
        %v711 = vld [vmem:[%s277 + $0x218] sm:$0xff]
        %v712 = vld [vmem:[%s277 + $0x220] sm:$0xff]
        %v713 = vld [vmem:[%s277 + $0x228] sm:$0xff]
        %v714 = vld [vmem:[%s277 + $0x230] sm:$0xff]
        %v715 = vld [vmem:[%s277 + $0x238] sm:$0xff]
        %v716 = vld [vmem:[%s277 + $0x240] sm:$0xff]
        %v717 = vld [vmem:[%s277 + $0x248] sm:$0xff]
        %v718 = vld [vmem:[%s277 + $0x250] sm:$0xff]
        %v719 = vld [vmem:[%s277 + $0x258] sm:$0xff]
        %v720 = vld [vmem:[%s277 + $0x260] sm:$0xff]
        %v721 = vld [vmem:[%s277 + $0x268] sm:$0xff]
        %v722 = vld [vmem:[%s277 + $0x270] sm:$0xff]
        %v723 = vld [vmem:[%s277 + $0x278] sm:$0xff]
        %v724 = vld [vmem:[%s277 + $0x280] sm:$0xff]
        %v725 = vld [vmem:[%s277 + $0x288] sm:$0xff]
        %v726 = vld [vmem:[%s277 + $0x290] sm:$0xff]
        %v727 = vld [vmem:[%s277 + $0x298] sm:$0xff]
        %v728 = vld [vmem:[%s277 + $0x2a0] sm:$0xff]
        %v729 = vld [vmem:[%s277 + $0x2a8] sm:$0xff]
        %v730 = vld [vmem:[%s277 + $0x2b0] sm:$0xff]
        %v731 = vld [vmem:[%s277 + $0x2b8] sm:$0xff]
        %v732 = vld [vmem:[%s277 + $0x2c0] sm:$0xff]
        %v733 = vld [vmem:[%s277 + $0x2c8] sm:$0xff]
        %v734 = vld [vmem:[%s277 + $0x2d0] sm:$0xff]
        %v735 = vld [vmem:[%s277 + $0x2d8] sm:$0xff]
        %v736 = vld [vmem:[%s277 + $0x2e0] sm:$0xff]
        %v737 = vld [vmem:[%s277 + $0x2e8] sm:$0xff]
        %v738 = vld [vmem:[%s277 + $0x2f0] sm:$0xff]
        %v739 = vld [vmem:[%s277 + $0x2f8] sm:$0xff]
        %v740 = vld [vmem:[%s277 + $0x300] sm:$0xff]
        %v741 = vld [vmem:[%s277 + $0x308] sm:$0xff]
        %v742 = vld [vmem:[%s277 + $0x310] sm:$0xff]
        %v743 = vld [vmem:[%s277 + $0x318] sm:$0xff]
        %v744 = vld [vmem:[%s277 + $0x320] sm:$0xff]
        %v745 = vld [vmem:[%s277 + $0x328] sm:$0xff]
        %v746 = vld [vmem:[%s277 + $0x330] sm:$0xff]
        %v747 = vld [vmem:[%s277 + $0x338] sm:$0xff]
        %v748 = vld [vmem:[%s277 + $0x340] sm:$0xff]
        %v749 = vld [vmem:[%s277 + $0x348] sm:$0xff]
        %v750 = vld [vmem:[%s277 + $0x350] sm:$0xff]
        %v751 = vld [vmem:[%s277 + $0x358] sm:$0xff]
        %v752 = vld [vmem:[%s277 + $0x360] sm:$0xff]
        %v753 = vld [vmem:[%s277 + $0x368] sm:$0xff]
        %v754 = vld [vmem:[%s277 + $0x370] sm:$0xff]
        %v755 = vld [vmem:[%s277 + $0x378] sm:$0xff]
        %v756 = vld [vmem:[%s277 + $0x380] sm:$0xff]
        %v757 = vld [vmem:[%s277 + $0x388] sm:$0xff]
        %v758 = vld [vmem:[%s277 + $0x390] sm:$0xff]
        %v759 = vld [vmem:[%s277 + $0x398] sm:$0xff]
        %v760 = vld [vmem:[%s277 + $0x3a0] sm:$0xff]
        %v761 = vld [vmem:[%s277 + $0x3a8] sm:$0xff]
        %v762 = vld [vmem:[%s277 + $0x3b0] sm:$0xff]
        %v763 = vld [vmem:[%s277 + $0x3b8] sm:$0xff]
        %v764 = vld [vmem:[%s277 + $0x3c0] sm:$0xff]
        %v765 = vld [vmem:[%s277 + $0x3c8] sm:$0xff]
        %v766 = vld [vmem:[%s277 + $0x3d0] sm:$0xff]
        %v767 = vld [vmem:[%s277 + $0x3d8] sm:$0xff]
        %v768 = vld [vmem:[%s277 + $0x3e0] sm:$0xff]
        %v769 = vld [vmem:[%s277 + $0x3e8] sm:$0xff]
        %v770 = vld [vmem:[%s277 + $0x3f0] sm:$0xff]
        %v771 = vld [vmem:[%s277 + $0x3f8] sm:$0xff]
        %v772 = vld [vmem:[%s277 + $0x400] sm:$0xff]
        %v773 = vld [vmem:[%s277 + $0x408] sm:$0xff]
        %v774 = vld [vmem:[%s277 + $0x410] sm:$0xff]
        %v775 = vld [vmem:[%s277 + $0x418] sm:$0xff]
        %v776 = vld [vmem:[%s277 + $0x420] sm:$0xff]
        %v777 = vld [vmem:[%s277 + $0x428] sm:$0xff]
        %v778 = vld [vmem:[%s277 + $0x430] sm:$0xff]
        %v779 = vld [vmem:[%s277 + $0x438] sm:$0xff]
        %v780 = vld [vmem:[%s277 + $0x440] sm:$0xff]
        %v781 = vld [vmem:[%s277 + $0x448] sm:$0xff]
        %v782 = vld [vmem:[%s277 + $0x450] sm:$0xff]
        %v783 = vld [vmem:[%s277 + $0x458] sm:$0xff]
        %v784 = vld [vmem:[%s277 + $0x460] sm:$0xff]
        %v785 = vld [vmem:[%s277 + $0x468] sm:$0xff]
        %v786 = vld [vmem:[%s277 + $0x470] sm:$0xff]
        %v787 = vld [vmem:[%s277 + $0x478] sm:$0xff]
        %v788 = vld [vmem:[%s277 + $0x480] sm:$0xff]
        %v789 = vld [vmem:[%s277 + $0x488] sm:$0xff]
        %v790 = vld [vmem:[%s277 + $0x490] sm:$0xff]
        %v791 = vld [vmem:[%s277 + $0x498] sm:$0xff]
        %v792 = vld [vmem:[%s277 + $0x4a0] sm:$0xff]
        %v793 = vld [vmem:[%s277 + $0x4a8] sm:$0xff]
        %v794 = vld [vmem:[%s277 + $0x4b0] sm:$0xff]
        %v795 = vld [vmem:[%s277 + $0x4b8] sm:$0xff]
        %v796 = vld [vmem:[%s277 + $0x4c0] sm:$0xff]
        %v797 = vld [vmem:[%s277 + $0x4c8] sm:$0xff]
        %v798 = vld [vmem:[%s277 + $0x4d0] sm:$0xff]
        %v799 = vld [vmem:[%s277 + $0x4d8] sm:$0xff]
        %v800 = vld [vmem:[%s277 + $0x4e0] sm:$0xff]
        %v801 = vld [vmem:[%s277 + $0x4e8] sm:$0xff]
        %v802 = vld [vmem:[%s277 + $0x4f0] sm:$0xff]
        %v803 = vld [vmem:[%s277 + $0x4f8] sm:$0xff]
        %v804 = vld [vmem:[%s277 + $0x500] sm:$0xff]
        %v805 = vld [vmem:[%s277 + $0x508] sm:$0xff]
        %v806 = vld [vmem:[%s277 + $0x510] sm:$0xff]
        %v807 = vld [vmem:[%s277 + $0x518] sm:$0xff]
        %v808 = vld [vmem:[%s277 + $0x520] sm:$0xff]
        %v809 = vld [vmem:[%s277 + $0x528] sm:$0xff]
        %v810 = vld [vmem:[%s277 + $0x530] sm:$0xff]
        %v811 = vld [vmem:[%s277 + $0x538] sm:$0xff]
        %v812 = vld [vmem:[%s277 + $0x540] sm:$0xff]
        %v813 = vld [vmem:[%s277 + $0x548] sm:$0xff]
        %v814 = vld [vmem:[%s277 + $0x550] sm:$0xff]
        %v815 = vld [vmem:[%s277 + $0x558] sm:$0xff]
        %v816 = vld [vmem:[%s277 + $0x560] sm:$0xff]
        %v817 = vld [vmem:[%s277 + $0x568] sm:$0xff]
        %v818 = vld [vmem:[%s277 + $0x570] sm:$0xff]
        %v819 = vld [vmem:[%s277 + $0x578] sm:$0xff]
        %v820 = vld [vmem:[%s277 + $0x580] sm:$0xff]
        %v821 = vld [vmem:[%s277 + $0x588] sm:$0xff]
        %v822 = vld [vmem:[%s277 + $0x590] sm:$0xff]
        %v823 = vld [vmem:[%s277 + $0x598] sm:$0xff]
        %v824 = vld [vmem:[%s277 + $0x5a0] sm:$0xff]
        %v825 = vld [vmem:[%s277 + $0x5a8] sm:$0xff]
        %v826 = vld [vmem:[%s277 + $0x5b0] sm:$0xff]
        %v827 = vld [vmem:[%s277 + $0x5b8] sm:$0xff]
        %v828 = vld [vmem:[%s277 + $0x5c0] sm:$0xff]
        %v829 = vld [vmem:[%s277 + $0x5c8] sm:$0xff]
        %v830 = vld [vmem:[%s277 + $0x5d0] sm:$0xff]
        %v831 = vld [vmem:[%s277 + $0x5d8] sm:$0xff]
        %v832 = vld [vmem:[%s277 + $0x5e0] sm:$0xff]
        %v833 = vld [vmem:[%s277 + $0x5e8] sm:$0xff]
        %v834 = vld [vmem:[%s277 + $0x5f0] sm:$0xff]
        %v835 = vld [vmem:[%s277 + $0x5f8] sm:$0xff]
        %v836 = vld [vmem:[%s277 + $0x600] sm:$0xff]
        %v837 = vld [vmem:[%s277 + $0x608] sm:$0xff]
        %v838 = vld [vmem:[%s277 + $0x610] sm:$0xff]
        %v839 = vld [vmem:[%s277 + $0x618] sm:$0xff]
        %v840 = vld [vmem:[%s277 + $0x620] sm:$0xff]
        %v841 = vld [vmem:[%s277 + $0x628] sm:$0xff]
        %v842 = vld [vmem:[%s277 + $0x630] sm:$0xff]
        %v843 = vld [vmem:[%s277 + $0x638] sm:$0xff]
        %v844 = vld [vmem:[%s277 + $0x640] sm:$0xff]
        %v845 = vld [vmem:[%s277 + $0x648] sm:$0xff]
        %v846 = vld [vmem:[%s277 + $0x650] sm:$0xff]
        %v847 = vld [vmem:[%s277 + $0x658] sm:$0xff]
        %v848 = vld [vmem:[%s277 + $0x660] sm:$0xff]
        %v849 = vld [vmem:[%s277 + $0x668] sm:$0xff]
        %v850 = vld [vmem:[%s277 + $0x670] sm:$0xff]
        %v851 = vld [vmem:[%s277 + $0x678] sm:$0xff]
        %v852 = vld [vmem:[%s277 + $0x680] sm:$0xff]
        %v853 = vld [vmem:[%s277 + $0x688] sm:$0xff]
        %v854 = vld [vmem:[%s277 + $0x690] sm:$0xff]
        %v855 = vld [vmem:[%s277 + $0x698] sm:$0xff]
        %v856 = vld [vmem:[%s277 + $0x6a0] sm:$0xff]
        %v857 = vld [vmem:[%s277 + $0x6a8] sm:$0xff]
        %v858 = vld [vmem:[%s277 + $0x6b0] sm:$0xff]
        %v859 = vld [vmem:[%s277 + $0x6b8] sm:$0xff]
        %v860 = vld [vmem:[%s277 + $0x6c0] sm:$0xff]
        %v861 = vld [vmem:[%s277 + $0x6c8] sm:$0xff]
        %v862 = vld [vmem:[%s277 + $0x6d0] sm:$0xff]
        %v863 = vld [vmem:[%s277 + $0x6d8] sm:$0xff]
        %v864 = vld [vmem:[%s277 + $0x6e0] sm:$0xff]
        %v865 = vld [vmem:[%s277 + $0x6e8] sm:$0xff]
        %v866 = vld [vmem:[%s277 + $0x6f0] sm:$0xff]
        %v867 = vld [vmem:[%s277 + $0x6f8] sm:$0xff]
        %v868 = vld [vmem:[%s277 + $0x700] sm:$0xff]
        %v869 = vld [vmem:[%s277 + $0x708] sm:$0xff]
        %v870 = vld [vmem:[%s277 + $0x710] sm:$0xff]
        %v871 = vld [vmem:[%s277 + $0x718] sm:$0xff]
        %v872 = vld [vmem:[%s277 + $0x720] sm:$0xff]
        %v873 = vld [vmem:[%s277 + $0x728] sm:$0xff]
        %v874 = vld [vmem:[%s277 + $0x730] sm:$0xff]
        %v875 = vld [vmem:[%s277 + $0x738] sm:$0xff]
        %v876 = vld [vmem:[%s277 + $0x740] sm:$0xff]
        %v877 = vld [vmem:[%s277 + $0x748] sm:$0xff]
        %v878 = vld [vmem:[%s277 + $0x750] sm:$0xff]
        %v879 = vld [vmem:[%s277 + $0x758] sm:$0xff]
        %v880 = vld [vmem:[%s277 + $0x760] sm:$0xff]
        %v881 = vld [vmem:[%s277 + $0x768] sm:$0xff]
        %v882 = vld [vmem:[%s277 + $0x770] sm:$0xff]
        %v883 = vld [vmem:[%s277 + $0x778] sm:$0xff]
        %v884 = vld [vmem:[%s277 + $0x780] sm:$0xff]
        %v885 = vld [vmem:[%s277 + $0x788] sm:$0xff]
        %v886 = vld [vmem:[%s277 + $0x790] sm:$0xff]
        %v887 = vld [vmem:[%s277 + $0x798] sm:$0xff]
        %v888 = vld [vmem:[%s277 + $0x7a0] sm:$0xff]
        %v889 = vld [vmem:[%s277 + $0x7a8] sm:$0xff]
        %v890 = vld [vmem:[%s277 + $0x7b0] sm:$0xff]
        %v891 = vld [vmem:[%s277 + $0x7b8] sm:$0xff]
        %v892 = vld [vmem:[%s277 + $0x7c0] sm:$0xff]
        %v893 = vld [vmem:[%s277 + $0x7c8] sm:$0xff]
        %v894 = vld [vmem:[%s277 + $0x7d0] sm:$0xff]
        %v895 = vld [vmem:[%s277 + $0x7d8] sm:$0xff]
        %v896 = vld [vmem:[%s277 + $0x7e0] sm:$0xff]
        %v897 = vld [vmem:[%s277 + $0x7e8] sm:$0xff]
        %v898 = vld [vmem:[%s277 + $0x7f0] sm:$0xff]
        %v899 = vld [vmem:[%s277 + $0x7f8] sm:$0xff]
        %v900 = vld [vmem:[%s286] sm:$0xf]
        %v902 = vlaneseq
        %v903 = vshrl.u32 %v902, 7
        %v904 = vsub.s32 0, %v903
        %v905 = vrot.slane %v900, %v904
        %v906 = vlaneseq
        %v907 = vshrl.u32 %v906, 7
        %v908 = vsub.s32 1, %v907
        %v909 = vrot.slane %v900, %v908
        %v910 = vlaneseq
        %v911 = vshrl.u32 %v910, 7
        %v912 = vsub.s32 2, %v911
        %v913 = vrot.slane %v900, %v912
        %v914 = vlaneseq
        %v915 = vshrl.u32 %v914, 7
        %v916 = vsub.s32 3, %v915
        %v917 = vrot.slane %v900, %v916
        %v1178 = vunpack.c.l.b16 %v644
        %v1179 = vunpack.c.h.b16 %v644
        %v1180 = vunpack.c.l.b16 %v645
        %v1181 = vunpack.c.h.b16 %v645
        %v1182 = vunpack.c.l.b16 %v646
        %v1183 = vunpack.c.h.b16 %v646
        %v1184 = vunpack.c.l.b16 %v647
        %v1185 = vunpack.c.h.b16 %v647
        %v1186 = vunpack.c.l.b16 %v648
        %v1187 = vunpack.c.h.b16 %v648
        %v1188 = vunpack.c.l.b16 %v649
        %v1189 = vunpack.c.h.b16 %v649
        %v1190 = vunpack.c.l.b16 %v650
        %v1191 = vunpack.c.h.b16 %v650
        %v1192 = vunpack.c.l.b16 %v651
        %v1193 = vunpack.c.h.b16 %v651
        %v1194 = vunpack.c.l.b16 %v652
        %v1195 = vunpack.c.h.b16 %v652
        %v1196 = vunpack.c.l.b16 %v653
        %v1197 = vunpack.c.h.b16 %v653
        %v1198 = vunpack.c.l.b16 %v654
        %v1199 = vunpack.c.h.b16 %v654
        %v1200 = vunpack.c.l.b16 %v655
        %v1201 = vunpack.c.h.b16 %v655
        %v1202 = vunpack.c.l.b16 %v656
        %v1203 = vunpack.c.h.b16 %v656
        %v1204 = vunpack.c.l.b16 %v657
        %v1205 = vunpack.c.h.b16 %v657
        %v1206 = vunpack.c.l.b16 %v658
        %v1207 = vunpack.c.h.b16 %v658
        %v1208 = vunpack.c.l.b16 %v659
        %v1209 = vunpack.c.h.b16 %v659
        %v1210 = vunpack.c.l.b16 %v660
        %v1211 = vunpack.c.h.b16 %v660
        %v1212 = vunpack.c.l.b16 %v661
        %v1213 = vunpack.c.h.b16 %v661
        %v1214 = vunpack.c.l.b16 %v662
        %v1215 = vunpack.c.h.b16 %v662
        %v1216 = vunpack.c.l.b16 %v663
        %v1217 = vunpack.c.h.b16 %v663
        %v1218 = vunpack.c.l.b16 %v664
        %v1219 = vunpack.c.h.b16 %v664
        %v1220 = vunpack.c.l.b16 %v665
        %v1221 = vunpack.c.h.b16 %v665
        %v1222 = vunpack.c.l.b16 %v666
        %v1223 = vunpack.c.h.b16 %v666
        %v1224 = vunpack.c.l.b16 %v667
        %v1225 = vunpack.c.h.b16 %v667
        %v1226 = vunpack.c.l.b16 %v668
        %v1227 = vunpack.c.h.b16 %v668
        %v1228 = vunpack.c.l.b16 %v669
        %v1229 = vunpack.c.h.b16 %v669
        %v1230 = vunpack.c.l.b16 %v670
        %v1231 = vunpack.c.h.b16 %v670
        %v1232 = vunpack.c.l.b16 %v671
        %v1233 = vunpack.c.h.b16 %v671
        %v1234 = vunpack.c.l.b16 %v672
        %v1235 = vunpack.c.h.b16 %v672
        %v1236 = vunpack.c.l.b16 %v673
        %v1237 = vunpack.c.h.b16 %v673
        %v1238 = vunpack.c.l.b16 %v674
        %v1239 = vunpack.c.h.b16 %v674
        %v1240 = vunpack.c.l.b16 %v675
        %v1241 = vunpack.c.h.b16 %v675
        %v1242 = vunpack.c.l.b16 %v676
        %v1243 = vunpack.c.h.b16 %v676
        %v1244 = vunpack.c.l.b16 %v677
        %v1245 = vunpack.c.h.b16 %v677
        %v1246 = vunpack.c.l.b16 %v678
        %v1247 = vunpack.c.h.b16 %v678
        %v1248 = vunpack.c.l.b16 %v679
        %v1249 = vunpack.c.h.b16 %v679
        %v1250 = vunpack.c.l.b16 %v680
        %v1251 = vunpack.c.h.b16 %v680
        %v1252 = vunpack.c.l.b16 %v681
        %v1253 = vunpack.c.h.b16 %v681
        %v1254 = vunpack.c.l.b16 %v682
        %v1255 = vunpack.c.h.b16 %v682
        %v1256 = vunpack.c.l.b16 %v683
        %v1257 = vunpack.c.h.b16 %v683
        %v1258 = vunpack.c.l.b16 %v684
        %v1259 = vunpack.c.h.b16 %v684
        %v1260 = vunpack.c.l.b16 %v685
        %v1261 = vunpack.c.h.b16 %v685
        %v1262 = vunpack.c.l.b16 %v686
        %v1263 = vunpack.c.h.b16 %v686
        %v1264 = vunpack.c.l.b16 %v687
        %v1265 = vunpack.c.h.b16 %v687
        %v1266 = vunpack.c.l.b16 %v688
        %v1267 = vunpack.c.h.b16 %v688
        %v1268 = vunpack.c.l.b16 %v689
        %v1269 = vunpack.c.h.b16 %v689
        %v1270 = vunpack.c.l.b16 %v690
        %v1271 = vunpack.c.h.b16 %v690
        %v1272 = vunpack.c.l.b16 %v691
        %v1273 = vunpack.c.h.b16 %v691
        %v1274 = vunpack.c.l.b16 %v692
        %v1275 = vunpack.c.h.b16 %v692
        %v1276 = vunpack.c.l.b16 %v693
        %v1277 = vunpack.c.h.b16 %v693
        %v1278 = vunpack.c.l.b16 %v694
        %v1279 = vunpack.c.h.b16 %v694
        %v1280 = vunpack.c.l.b16 %v695
        %v1281 = vunpack.c.h.b16 %v695
        %v1282 = vunpack.c.l.b16 %v696
        %v1283 = vunpack.c.h.b16 %v696
        %v1284 = vunpack.c.l.b16 %v697
        %v1285 = vunpack.c.h.b16 %v697
        %v1286 = vunpack.c.l.b16 %v698
        %v1287 = vunpack.c.h.b16 %v698
        %v1288 = vunpack.c.l.b16 %v699
        %v1289 = vunpack.c.h.b16 %v699
        %v1290 = vunpack.c.l.b16 %v700
        %v1291 = vunpack.c.h.b16 %v700
        %v1292 = vunpack.c.l.b16 %v701
        %v1293 = vunpack.c.h.b16 %v701
        %v1294 = vunpack.c.l.b16 %v702
        %v1295 = vunpack.c.h.b16 %v702
        %v1296 = vunpack.c.l.b16 %v703
        %v1297 = vunpack.c.h.b16 %v703
        %v1298 = vunpack.c.l.b16 %v704
        %v1299 = vunpack.c.h.b16 %v704
        %v1300 = vunpack.c.l.b16 %v705
        %v1301 = vunpack.c.h.b16 %v705
        %v1302 = vunpack.c.l.b16 %v706
        %v1303 = vunpack.c.h.b16 %v706
        %v1304 = vunpack.c.l.b16 %v707
        %v1305 = vunpack.c.h.b16 %v707
        %v1306 = vunpack.c.l.b16 %v708
        %v1307 = vunpack.c.h.b16 %v708
        %v1308 = vunpack.c.l.b16 %v709
        %v1309 = vunpack.c.h.b16 %v709
        %v1310 = vunpack.c.l.b16 %v710
        %v1311 = vunpack.c.h.b16 %v710
        %v1312 = vunpack.c.l.b16 %v711
        %v1313 = vunpack.c.h.b16 %v711
        %v1314 = vunpack.c.l.b16 %v712
        %v1315 = vunpack.c.h.b16 %v712
        %v1316 = vunpack.c.l.b16 %v713
        %v1317 = vunpack.c.h.b16 %v713
        %v1318 = vunpack.c.l.b16 %v714
        %v1319 = vunpack.c.h.b16 %v714
        %v1320 = vunpack.c.l.b16 %v715
        %v1321 = vunpack.c.h.b16 %v715
        %v1322 = vunpack.c.l.b16 %v716
        %v1323 = vunpack.c.h.b16 %v716
        %v1324 = vunpack.c.l.b16 %v717
        %v1325 = vunpack.c.h.b16 %v717
        %v1326 = vunpack.c.l.b16 %v718
        %v1327 = vunpack.c.h.b16 %v718
        %v1328 = vunpack.c.l.b16 %v719
        %v1329 = vunpack.c.h.b16 %v719
        %v1330 = vunpack.c.l.b16 %v720
        %v1331 = vunpack.c.h.b16 %v720
        %v1332 = vunpack.c.l.b16 %v721
        %v1333 = vunpack.c.h.b16 %v721
        %v1334 = vunpack.c.l.b16 %v722
        %v1335 = vunpack.c.h.b16 %v722
        %v1336 = vunpack.c.l.b16 %v723
        %v1337 = vunpack.c.h.b16 %v723
        %v1338 = vunpack.c.l.b16 %v724
        %v1339 = vunpack.c.h.b16 %v724
        %v1340 = vunpack.c.l.b16 %v725
        %v1341 = vunpack.c.h.b16 %v725
        %v1342 = vunpack.c.l.b16 %v726
        %v1343 = vunpack.c.h.b16 %v726
        %v1344 = vunpack.c.l.b16 %v727
        %v1345 = vunpack.c.h.b16 %v727
        %v1346 = vunpack.c.l.b16 %v728
        %v1347 = vunpack.c.h.b16 %v728
        %v1348 = vunpack.c.l.b16 %v729
        %v1349 = vunpack.c.h.b16 %v729
        %v1350 = vunpack.c.l.b16 %v730
        %v1351 = vunpack.c.h.b16 %v730
        %v1352 = vunpack.c.l.b16 %v731
        %v1353 = vunpack.c.h.b16 %v731
        %v1354 = vunpack.c.l.b16 %v732
        %v1355 = vunpack.c.h.b16 %v732
        %v1356 = vunpack.c.l.b16 %v733
        %v1357 = vunpack.c.h.b16 %v733
        %v1358 = vunpack.c.l.b16 %v734
        %v1359 = vunpack.c.h.b16 %v734
        %v1360 = vunpack.c.l.b16 %v735
        %v1361 = vunpack.c.h.b16 %v735
        %v1362 = vunpack.c.l.b16 %v736
        %v1363 = vunpack.c.h.b16 %v736
        %v1364 = vunpack.c.l.b16 %v737
        %v1365 = vunpack.c.h.b16 %v737
        %v1366 = vunpack.c.l.b16 %v738
        %v1367 = vunpack.c.h.b16 %v738
        %v1368 = vunpack.c.l.b16 %v739
        %v1369 = vunpack.c.h.b16 %v739
        %v1370 = vunpack.c.l.b16 %v740
        %v1371 = vunpack.c.h.b16 %v740
        %v1372 = vunpack.c.l.b16 %v741
        %v1373 = vunpack.c.h.b16 %v741
        %v1374 = vunpack.c.l.b16 %v742
        %v1375 = vunpack.c.h.b16 %v742
        %v1376 = vunpack.c.l.b16 %v743
        %v1377 = vunpack.c.h.b16 %v743
        %v1378 = vunpack.c.l.b16 %v744
        %v1379 = vunpack.c.h.b16 %v744
        %v1380 = vunpack.c.l.b16 %v745
        %v1381 = vunpack.c.h.b16 %v745
        %v1382 = vunpack.c.l.b16 %v746
        %v1383 = vunpack.c.h.b16 %v746
        %v1384 = vunpack.c.l.b16 %v747
        %v1385 = vunpack.c.h.b16 %v747
        %v1386 = vunpack.c.l.b16 %v748
        %v1387 = vunpack.c.h.b16 %v748
        %v1388 = vunpack.c.l.b16 %v749
        %v1389 = vunpack.c.h.b16 %v749
        %v1390 = vunpack.c.l.b16 %v750
        %v1391 = vunpack.c.h.b16 %v750
        %v1392 = vunpack.c.l.b16 %v751
        %v1393 = vunpack.c.h.b16 %v751
        %v1394 = vunpack.c.l.b16 %v752
        %v1395 = vunpack.c.h.b16 %v752
        %v1396 = vunpack.c.l.b16 %v753
        %v1397 = vunpack.c.h.b16 %v753
        %v1398 = vunpack.c.l.b16 %v754
        %v1399 = vunpack.c.h.b16 %v754
        %v1400 = vunpack.c.l.b16 %v755
        %v1401 = vunpack.c.h.b16 %v755
        %v1402 = vunpack.c.l.b16 %v756
        %v1403 = vunpack.c.h.b16 %v756
        %v1404 = vunpack.c.l.b16 %v757
        %v1405 = vunpack.c.h.b16 %v757
        %v1406 = vunpack.c.l.b16 %v758
        %v1407 = vunpack.c.h.b16 %v758
        %v1408 = vunpack.c.l.b16 %v759
        %v1409 = vunpack.c.h.b16 %v759
        %v1410 = vunpack.c.l.b16 %v760
        %v1411 = vunpack.c.h.b16 %v760
        %v1412 = vunpack.c.l.b16 %v761
        %v1413 = vunpack.c.h.b16 %v761
        %v1414 = vunpack.c.l.b16 %v762
        %v1415 = vunpack.c.h.b16 %v762
        %v1416 = vunpack.c.l.b16 %v763
        %v1417 = vunpack.c.h.b16 %v763
        %v1418 = vunpack.c.l.b16 %v764
        %v1419 = vunpack.c.h.b16 %v764
        %v1420 = vunpack.c.l.b16 %v765
        %v1421 = vunpack.c.h.b16 %v765
        %v1422 = vunpack.c.l.b16 %v766
        %v1423 = vunpack.c.h.b16 %v766
        %v1424 = vunpack.c.l.b16 %v767
        %v1425 = vunpack.c.h.b16 %v767
        %v1426 = vunpack.c.l.b16 %v768
        %v1427 = vunpack.c.h.b16 %v768
        %v1428 = vunpack.c.l.b16 %v769
        %v1429 = vunpack.c.h.b16 %v769
        %v1430 = vunpack.c.l.b16 %v770
        %v1431 = vunpack.c.h.b16 %v770
        %v1432 = vunpack.c.l.b16 %v771
        %v1433 = vunpack.c.h.b16 %v771
        %v1434 = vunpack.c.l.b16 %v772
        %v1435 = vunpack.c.h.b16 %v772
        %v1436 = vunpack.c.l.b16 %v773
        %v1437 = vunpack.c.h.b16 %v773
        %v1438 = vunpack.c.l.b16 %v774
        %v1439 = vunpack.c.h.b16 %v774
        %v1440 = vunpack.c.l.b16 %v775
        %v1441 = vunpack.c.h.b16 %v775
        %v1442 = vunpack.c.l.b16 %v776
        %v1443 = vunpack.c.h.b16 %v776
        %v1444 = vunpack.c.l.b16 %v777
        %v1445 = vunpack.c.h.b16 %v777
        %v1446 = vunpack.c.l.b16 %v778
        %v1447 = vunpack.c.h.b16 %v778
        %v1448 = vunpack.c.l.b16 %v779
        %v1449 = vunpack.c.h.b16 %v779
        %v1450 = vunpack.c.l.b16 %v780
        %v1451 = vunpack.c.h.b16 %v780
        %v1452 = vunpack.c.l.b16 %v781
        %v1453 = vunpack.c.h.b16 %v781
        %v1454 = vunpack.c.l.b16 %v782
        %v1455 = vunpack.c.h.b16 %v782
        %v1456 = vunpack.c.l.b16 %v783
        %v1457 = vunpack.c.h.b16 %v783
        %v1458 = vunpack.c.l.b16 %v784
        %v1459 = vunpack.c.h.b16 %v784
        %v1460 = vunpack.c.l.b16 %v785
        %v1461 = vunpack.c.h.b16 %v785
        %v1462 = vunpack.c.l.b16 %v786
        %v1463 = vunpack.c.h.b16 %v786
        %v1464 = vunpack.c.l.b16 %v787
        %v1465 = vunpack.c.h.b16 %v787
        %v1466 = vunpack.c.l.b16 %v788
        %v1467 = vunpack.c.h.b16 %v788
        %v1468 = vunpack.c.l.b16 %v789
        %v1469 = vunpack.c.h.b16 %v789
        %v1470 = vunpack.c.l.b16 %v790
        %v1471 = vunpack.c.h.b16 %v790
        %v1472 = vunpack.c.l.b16 %v791
        %v1473 = vunpack.c.h.b16 %v791
        %v1474 = vunpack.c.l.b16 %v792
        %v1475 = vunpack.c.h.b16 %v792
        %v1476 = vunpack.c.l.b16 %v793
        %v1477 = vunpack.c.h.b16 %v793
        %v1478 = vunpack.c.l.b16 %v794
        %v1479 = vunpack.c.h.b16 %v794
        %v1480 = vunpack.c.l.b16 %v795
        %v1481 = vunpack.c.h.b16 %v795
        %v1482 = vunpack.c.l.b16 %v796
        %v1483 = vunpack.c.h.b16 %v796
        %v1484 = vunpack.c.l.b16 %v797
        %v1485 = vunpack.c.h.b16 %v797
        %v1486 = vunpack.c.l.b16 %v798
        %v1487 = vunpack.c.h.b16 %v798
        %v1488 = vunpack.c.l.b16 %v799
        %v1489 = vunpack.c.h.b16 %v799
        %v1490 = vunpack.c.l.b16 %v800
        %v1491 = vunpack.c.h.b16 %v800
        %v1492 = vunpack.c.l.b16 %v801
        %v1493 = vunpack.c.h.b16 %v801
        %v1494 = vunpack.c.l.b16 %v802
        %v1495 = vunpack.c.h.b16 %v802
        %v1496 = vunpack.c.l.b16 %v803
        %v1497 = vunpack.c.h.b16 %v803
        %v1498 = vunpack.c.l.b16 %v804
        %v1499 = vunpack.c.h.b16 %v804
        %v1500 = vunpack.c.l.b16 %v805
        %v1501 = vunpack.c.h.b16 %v805
        %v1502 = vunpack.c.l.b16 %v806
        %v1503 = vunpack.c.h.b16 %v806
        %v1504 = vunpack.c.l.b16 %v807
        %v1505 = vunpack.c.h.b16 %v807
        %v1506 = vunpack.c.l.b16 %v808
        %v1507 = vunpack.c.h.b16 %v808
        %v1508 = vunpack.c.l.b16 %v809
        %v1509 = vunpack.c.h.b16 %v809
        %v1510 = vunpack.c.l.b16 %v810
        %v1511 = vunpack.c.h.b16 %v810
        %v1512 = vunpack.c.l.b16 %v811
        %v1513 = vunpack.c.h.b16 %v811
        %v1514 = vunpack.c.l.b16 %v812
        %v1515 = vunpack.c.h.b16 %v812
        %v1516 = vunpack.c.l.b16 %v813
        %v1517 = vunpack.c.h.b16 %v813
        %v1518 = vunpack.c.l.b16 %v814
        %v1519 = vunpack.c.h.b16 %v814
        %v1520 = vunpack.c.l.b16 %v815
        %v1521 = vunpack.c.h.b16 %v815
        %v1522 = vunpack.c.l.b16 %v816
        %v1523 = vunpack.c.h.b16 %v816
        %v1524 = vunpack.c.l.b16 %v817
        %v1525 = vunpack.c.h.b16 %v817
        %v1526 = vunpack.c.l.b16 %v818
        %v1527 = vunpack.c.h.b16 %v818
        %v1528 = vunpack.c.l.b16 %v819
        %v1529 = vunpack.c.h.b16 %v819
        %v1530 = vunpack.c.l.b16 %v820
        %v1531 = vunpack.c.h.b16 %v820
        %v1532 = vunpack.c.l.b16 %v821
        %v1533 = vunpack.c.h.b16 %v821
        %v1534 = vunpack.c.l.b16 %v822
        %v1535 = vunpack.c.h.b16 %v822
        %v1536 = vunpack.c.l.b16 %v823
        %v1537 = vunpack.c.h.b16 %v823
        %v1538 = vunpack.c.l.b16 %v824
        %v1539 = vunpack.c.h.b16 %v824
        %v1540 = vunpack.c.l.b16 %v825
        %v1541 = vunpack.c.h.b16 %v825
        %v1542 = vunpack.c.l.b16 %v826
        %v1543 = vunpack.c.h.b16 %v826
        %v1544 = vunpack.c.l.b16 %v827
        %v1545 = vunpack.c.h.b16 %v827
        %v1546 = vunpack.c.l.b16 %v828
        %v1547 = vunpack.c.h.b16 %v828
        %v1548 = vunpack.c.l.b16 %v829
        %v1549 = vunpack.c.h.b16 %v829
        %v1550 = vunpack.c.l.b16 %v830
        %v1551 = vunpack.c.h.b16 %v830
        %v1552 = vunpack.c.l.b16 %v831
        %v1553 = vunpack.c.h.b16 %v831
        %v1554 = vunpack.c.l.b16 %v832
        %v1555 = vunpack.c.h.b16 %v832
        %v1556 = vunpack.c.l.b16 %v833
        %v1557 = vunpack.c.h.b16 %v833
        %v1558 = vunpack.c.l.b16 %v834
        %v1559 = vunpack.c.h.b16 %v834
        %v1560 = vunpack.c.l.b16 %v835
        %v1561 = vunpack.c.h.b16 %v835
        %v1562 = vunpack.c.l.b16 %v836
        %v1563 = vunpack.c.h.b16 %v836
        %v1564 = vunpack.c.l.b16 %v837
        %v1565 = vunpack.c.h.b16 %v837
        %v1566 = vunpack.c.l.b16 %v838
        %v1567 = vunpack.c.h.b16 %v838
        %v1568 = vunpack.c.l.b16 %v839
        %v1569 = vunpack.c.h.b16 %v839
        %v1570 = vunpack.c.l.b16 %v840
        %v1571 = vunpack.c.h.b16 %v840
        %v1572 = vunpack.c.l.b16 %v841
        %v1573 = vunpack.c.h.b16 %v841
        %v1574 = vunpack.c.l.b16 %v842
        %v1575 = vunpack.c.h.b16 %v842
        %v1576 = vunpack.c.l.b16 %v843
        %v1577 = vunpack.c.h.b16 %v843
        %v1578 = vunpack.c.l.b16 %v844
        %v1579 = vunpack.c.h.b16 %v844
        %v1580 = vunpack.c.l.b16 %v845
        %v1581 = vunpack.c.h.b16 %v845
        %v1582 = vunpack.c.l.b16 %v846
        %v1583 = vunpack.c.h.b16 %v846
        %v1584 = vunpack.c.l.b16 %v847
        %v1585 = vunpack.c.h.b16 %v847
        %v1586 = vunpack.c.l.b16 %v848
        %v1587 = vunpack.c.h.b16 %v848
        %v1588 = vunpack.c.l.b16 %v849
        %v1589 = vunpack.c.h.b16 %v849
        %v1590 = vunpack.c.l.b16 %v850
        %v1591 = vunpack.c.h.b16 %v850
        %v1592 = vunpack.c.l.b16 %v851
        %v1593 = vunpack.c.h.b16 %v851
        %v1594 = vunpack.c.l.b16 %v852
        %v1595 = vunpack.c.h.b16 %v852
        %v1596 = vunpack.c.l.b16 %v853
        %v1597 = vunpack.c.h.b16 %v853
        %v1598 = vunpack.c.l.b16 %v854
        %v1599 = vunpack.c.h.b16 %v854
        %v1600 = vunpack.c.l.b16 %v855
        %v1601 = vunpack.c.h.b16 %v855
        %v1602 = vunpack.c.l.b16 %v856
        %v1603 = vunpack.c.h.b16 %v856
        %v1604 = vunpack.c.l.b16 %v857
        %v1605 = vunpack.c.h.b16 %v857
        %v1606 = vunpack.c.l.b16 %v858
        %v1607 = vunpack.c.h.b16 %v858
        %v1608 = vunpack.c.l.b16 %v859
        %v1609 = vunpack.c.h.b16 %v859
        %v1610 = vunpack.c.l.b16 %v860
        %v1611 = vunpack.c.h.b16 %v860
        %v1612 = vunpack.c.l.b16 %v861
        %v1613 = vunpack.c.h.b16 %v861
        %v1614 = vunpack.c.l.b16 %v862
        %v1615 = vunpack.c.h.b16 %v862
        %v1616 = vunpack.c.l.b16 %v863
        %v1617 = vunpack.c.h.b16 %v863
        %v1618 = vunpack.c.l.b16 %v864
        %v1619 = vunpack.c.h.b16 %v864
        %v1620 = vunpack.c.l.b16 %v865
        %v1621 = vunpack.c.h.b16 %v865
        %v1622 = vunpack.c.l.b16 %v866
        %v1623 = vunpack.c.h.b16 %v866
        %v1624 = vunpack.c.l.b16 %v867
        %v1625 = vunpack.c.h.b16 %v867
        %v1626 = vunpack.c.l.b16 %v868
        %v1627 = vunpack.c.h.b16 %v868
        %v1628 = vunpack.c.l.b16 %v869
        %v1629 = vunpack.c.h.b16 %v869
        %v1630 = vunpack.c.l.b16 %v870
        %v1631 = vunpack.c.h.b16 %v870
        %v1632 = vunpack.c.l.b16 %v871
        %v1633 = vunpack.c.h.b16 %v871
        %v1634 = vunpack.c.l.b16 %v872
        %v1635 = vunpack.c.h.b16 %v872
        %v1636 = vunpack.c.l.b16 %v873
        %v1637 = vunpack.c.h.b16 %v873
        %v1638 = vunpack.c.l.b16 %v874
        %v1639 = vunpack.c.h.b16 %v874
        %v1640 = vunpack.c.l.b16 %v875
        %v1641 = vunpack.c.h.b16 %v875
        %v1642 = vunpack.c.l.b16 %v876
        %v1643 = vunpack.c.h.b16 %v876
        %v1644 = vunpack.c.l.b16 %v877
        %v1645 = vunpack.c.h.b16 %v877
        %v1646 = vunpack.c.l.b16 %v878
        %v1647 = vunpack.c.h.b16 %v878
        %v1648 = vunpack.c.l.b16 %v879
        %v1649 = vunpack.c.h.b16 %v879
        %v1650 = vunpack.c.l.b16 %v880
        %v1651 = vunpack.c.h.b16 %v880
        %v1652 = vunpack.c.l.b16 %v881
        %v1653 = vunpack.c.h.b16 %v881
        %v1654 = vunpack.c.l.b16 %v882
        %v1655 = vunpack.c.h.b16 %v882
        %v1656 = vunpack.c.l.b16 %v883
        %v1657 = vunpack.c.h.b16 %v883
        %v1658 = vunpack.c.l.b16 %v884
        %v1659 = vunpack.c.h.b16 %v884
        %v1660 = vunpack.c.l.b16 %v885
        %v1661 = vunpack.c.h.b16 %v885
        %v1662 = vunpack.c.l.b16 %v886
        %v1663 = vunpack.c.h.b16 %v886
        %v1664 = vunpack.c.l.b16 %v887
        %v1665 = vunpack.c.h.b16 %v887
        %v1666 = vunpack.c.l.b16 %v888
        %v1667 = vunpack.c.h.b16 %v888
        %v1668 = vunpack.c.l.b16 %v889
        %v1669 = vunpack.c.h.b16 %v889
        %v1670 = vunpack.c.l.b16 %v890
        %v1671 = vunpack.c.h.b16 %v890
        %v1672 = vunpack.c.l.b16 %v891
        %v1673 = vunpack.c.h.b16 %v891
        %v1674 = vunpack.c.l.b16 %v892
        %v1675 = vunpack.c.h.b16 %v892
        %v1676 = vunpack.c.l.b16 %v893
        %v1677 = vunpack.c.h.b16 %v893
        %v1678 = vunpack.c.l.b16 %v894
        %v1679 = vunpack.c.h.b16 %v894
        %v1680 = vunpack.c.l.b16 %v895
        %v1681 = vunpack.c.h.b16 %v895
        %v1682 = vunpack.c.l.b16 %v896
        %v1683 = vunpack.c.h.b16 %v896
        %v1684 = vunpack.c.l.b16 %v897
        %v1685 = vunpack.c.h.b16 %v897
        %v1686 = vunpack.c.l.b16 %v898
        %v1687 = vunpack.c.h.b16 %v898
        %v1688 = vunpack.c.l.b16 %v899
        %v1689 = vunpack.c.h.b16 %v899
        %v1690 = vpack.c.b16 %v1182, %v1178
        %v1691 = vpack.c.b16 %v1183, %v1179
        %v1692 = vpack.c.b16 %v1184, %v1180
        %v1693 = vpack.c.b16 %v1185, %v1181
        %v1694 = vpack.c.b16 %v1190, %v1186
        %v1695 = vpack.c.b16 %v1191, %v1187
        %v1696 = vpack.c.b16 %v1192, %v1188
        %v1697 = vpack.c.b16 %v1193, %v1189
        %v1698 = vpack.c.b16 %v1198, %v1194
        %v1699 = vpack.c.b16 %v1199, %v1195
        %v1700 = vpack.c.b16 %v1200, %v1196
        %v1701 = vpack.c.b16 %v1201, %v1197
        %v1702 = vpack.c.b16 %v1206, %v1202
        %v1703 = vpack.c.b16 %v1207, %v1203
        %v1704 = vpack.c.b16 %v1208, %v1204
        %v1705 = vpack.c.b16 %v1209, %v1205
        %v1706 = vpack.c.b16 %v1214, %v1210
        %v1707 = vpack.c.b16 %v1215, %v1211
        %v1708 = vpack.c.b16 %v1216, %v1212
        %v1709 = vpack.c.b16 %v1217, %v1213
        %v1710 = vpack.c.b16 %v1222, %v1218
        %v1711 = vpack.c.b16 %v1223, %v1219
        %v1712 = vpack.c.b16 %v1224, %v1220
        %v1713 = vpack.c.b16 %v1225, %v1221
        %v1714 = vpack.c.b16 %v1230, %v1226
        %v1715 = vpack.c.b16 %v1231, %v1227
        %v1716 = vpack.c.b16 %v1232, %v1228
        %v1717 = vpack.c.b16 %v1233, %v1229
        %v1718 = vpack.c.b16 %v1238, %v1234
        %v1719 = vpack.c.b16 %v1239, %v1235
        %v1720 = vpack.c.b16 %v1240, %v1236
        %v1721 = vpack.c.b16 %v1241, %v1237
        %v1722 = vpack.c.b16 %v1246, %v1242
        %v1723 = vpack.c.b16 %v1247, %v1243
        %v1724 = vpack.c.b16 %v1248, %v1244
        %v1725 = vpack.c.b16 %v1249, %v1245
        %v1726 = vpack.c.b16 %v1254, %v1250
        %v1727 = vpack.c.b16 %v1255, %v1251
        %v1728 = vpack.c.b16 %v1256, %v1252
        %v1729 = vpack.c.b16 %v1257, %v1253
        %v1730 = vpack.c.b16 %v1262, %v1258
        %v1731 = vpack.c.b16 %v1263, %v1259
        %v1732 = vpack.c.b16 %v1264, %v1260
        %v1733 = vpack.c.b16 %v1265, %v1261
        %v1734 = vpack.c.b16 %v1270, %v1266
        %v1735 = vpack.c.b16 %v1271, %v1267
        %v1736 = vpack.c.b16 %v1272, %v1268
        %v1737 = vpack.c.b16 %v1273, %v1269
        %v1738 = vpack.c.b16 %v1278, %v1274
        %v1739 = vpack.c.b16 %v1279, %v1275
        %v1740 = vpack.c.b16 %v1280, %v1276
        %v1741 = vpack.c.b16 %v1281, %v1277
        %v1742 = vpack.c.b16 %v1286, %v1282
        %v1743 = vpack.c.b16 %v1287, %v1283
        %v1744 = vpack.c.b16 %v1288, %v1284
        %v1745 = vpack.c.b16 %v1289, %v1285
        %v1746 = vpack.c.b16 %v1294, %v1290
        %v1747 = vpack.c.b16 %v1295, %v1291
        %v1748 = vpack.c.b16 %v1296, %v1292
        %v1749 = vpack.c.b16 %v1297, %v1293
        %v1750 = vpack.c.b16 %v1302, %v1298
        %v1751 = vpack.c.b16 %v1303, %v1299
        %v1752 = vpack.c.b16 %v1304, %v1300
        %v1753 = vpack.c.b16 %v1305, %v1301
        %v1754 = vpack.c.b16 %v1310, %v1306
        %v1755 = vpack.c.b16 %v1311, %v1307
        %v1756 = vpack.c.b16 %v1312, %v1308
        %v1757 = vpack.c.b16 %v1313, %v1309
        %v1758 = vpack.c.b16 %v1318, %v1314
        %v1759 = vpack.c.b16 %v1319, %v1315
        %v1760 = vpack.c.b16 %v1320, %v1316
        %v1761 = vpack.c.b16 %v1321, %v1317
        %v1762 = vpack.c.b16 %v1326, %v1322
        %v1763 = vpack.c.b16 %v1327, %v1323
        %v1764 = vpack.c.b16 %v1328, %v1324
        %v1765 = vpack.c.b16 %v1329, %v1325
        %v1766 = vpack.c.b16 %v1334, %v1330
        %v1767 = vpack.c.b16 %v1335, %v1331
        %v1768 = vpack.c.b16 %v1336, %v1332
        %v1769 = vpack.c.b16 %v1337, %v1333
        %v1770 = vpack.c.b16 %v1342, %v1338
        %v1771 = vpack.c.b16 %v1343, %v1339
        %v1772 = vpack.c.b16 %v1344, %v1340
        %v1773 = vpack.c.b16 %v1345, %v1341
        %v1774 = vpack.c.b16 %v1350, %v1346
        %v1775 = vpack.c.b16 %v1351, %v1347
        %v1776 = vpack.c.b16 %v1352, %v1348
        %v1777 = vpack.c.b16 %v1353, %v1349
        %v1778 = vpack.c.b16 %v1358, %v1354
        %v1779 = vpack.c.b16 %v1359, %v1355
        %v1780 = vpack.c.b16 %v1360, %v1356
        %v1781 = vpack.c.b16 %v1361, %v1357
        %v1782 = vpack.c.b16 %v1366, %v1362
        %v1783 = vpack.c.b16 %v1367, %v1363
        %v1784 = vpack.c.b16 %v1368, %v1364
        %v1785 = vpack.c.b16 %v1369, %v1365
        %v1786 = vpack.c.b16 %v1374, %v1370
        %v1787 = vpack.c.b16 %v1375, %v1371
        %v1788 = vpack.c.b16 %v1376, %v1372
        %v1789 = vpack.c.b16 %v1377, %v1373
        %v1790 = vpack.c.b16 %v1382, %v1378
        %v1791 = vpack.c.b16 %v1383, %v1379
        %v1792 = vpack.c.b16 %v1384, %v1380
        %v1793 = vpack.c.b16 %v1385, %v1381
        %v1794 = vpack.c.b16 %v1390, %v1386
        %v1795 = vpack.c.b16 %v1391, %v1387
        %v1796 = vpack.c.b16 %v1392, %v1388
        %v1797 = vpack.c.b16 %v1393, %v1389
        %v1798 = vpack.c.b16 %v1398, %v1394
        %v1799 = vpack.c.b16 %v1399, %v1395
        %v1800 = vpack.c.b16 %v1400, %v1396
        %v1801 = vpack.c.b16 %v1401, %v1397
        %v1802 = vpack.c.b16 %v1406, %v1402
        %v1803 = vpack.c.b16 %v1407, %v1403
        %v1804 = vpack.c.b16 %v1408, %v1404
        %v1805 = vpack.c.b16 %v1409, %v1405
        %v1806 = vpack.c.b16 %v1414, %v1410
        %v1807 = vpack.c.b16 %v1415, %v1411
        %v1808 = vpack.c.b16 %v1416, %v1412
        %v1809 = vpack.c.b16 %v1417, %v1413
        %v1810 = vpack.c.b16 %v1422, %v1418
        %v1811 = vpack.c.b16 %v1423, %v1419
        %v1812 = vpack.c.b16 %v1424, %v1420
        %v1813 = vpack.c.b16 %v1425, %v1421
        %v1814 = vpack.c.b16 %v1430, %v1426
        %v1815 = vpack.c.b16 %v1431, %v1427
        %v1816 = vpack.c.b16 %v1432, %v1428
        %v1817 = vpack.c.b16 %v1433, %v1429
        %v1818 = vpack.c.b16 %v1438, %v1434
        %v1819 = vpack.c.b16 %v1439, %v1435
        %v1820 = vpack.c.b16 %v1440, %v1436
        %v1821 = vpack.c.b16 %v1441, %v1437
        %v1822 = vpack.c.b16 %v1446, %v1442
        %v1823 = vpack.c.b16 %v1447, %v1443
        %v1824 = vpack.c.b16 %v1448, %v1444
        %v1825 = vpack.c.b16 %v1449, %v1445
        %v1826 = vpack.c.b16 %v1454, %v1450
        %v1827 = vpack.c.b16 %v1455, %v1451
        %v1828 = vpack.c.b16 %v1456, %v1452
        %v1829 = vpack.c.b16 %v1457, %v1453
        %v1830 = vpack.c.b16 %v1462, %v1458
        %v1831 = vpack.c.b16 %v1463, %v1459
        %v1832 = vpack.c.b16 %v1464, %v1460
        %v1833 = vpack.c.b16 %v1465, %v1461
        %v1834 = vpack.c.b16 %v1470, %v1466
        %v1835 = vpack.c.b16 %v1471, %v1467
        %v1836 = vpack.c.b16 %v1472, %v1468
        %v1837 = vpack.c.b16 %v1473, %v1469
        %v1838 = vpack.c.b16 %v1478, %v1474
        %v1839 = vpack.c.b16 %v1479, %v1475
        %v1840 = vpack.c.b16 %v1480, %v1476
        %v1841 = vpack.c.b16 %v1481, %v1477
        %v1842 = vpack.c.b16 %v1486, %v1482
        %v1843 = vpack.c.b16 %v1487, %v1483
        %v1844 = vpack.c.b16 %v1488, %v1484
        %v1845 = vpack.c.b16 %v1489, %v1485
        %v1846 = vpack.c.b16 %v1494, %v1490
        %v1847 = vpack.c.b16 %v1495, %v1491
        %v1848 = vpack.c.b16 %v1496, %v1492
        %v1849 = vpack.c.b16 %v1497, %v1493
        %v1850 = vpack.c.b16 %v1502, %v1498
        %v1851 = vpack.c.b16 %v1503, %v1499
        %v1852 = vpack.c.b16 %v1504, %v1500
        %v1853 = vpack.c.b16 %v1505, %v1501
        %v1854 = vpack.c.b16 %v1510, %v1506
        %v1855 = vpack.c.b16 %v1511, %v1507
        %v1856 = vpack.c.b16 %v1512, %v1508
        %v1857 = vpack.c.b16 %v1513, %v1509
        %v1858 = vpack.c.b16 %v1518, %v1514
        %v1859 = vpack.c.b16 %v1519, %v1515
        %v1860 = vpack.c.b16 %v1520, %v1516
        %v1861 = vpack.c.b16 %v1521, %v1517
        %v1862 = vpack.c.b16 %v1526, %v1522
        %v1863 = vpack.c.b16 %v1527, %v1523
        %v1864 = vpack.c.b16 %v1528, %v1524
        %v1865 = vpack.c.b16 %v1529, %v1525
        %v1866 = vpack.c.b16 %v1534, %v1530
        %v1867 = vpack.c.b16 %v1535, %v1531
        %v1868 = vpack.c.b16 %v1536, %v1532
        %v1869 = vpack.c.b16 %v1537, %v1533
        %v1870 = vpack.c.b16 %v1542, %v1538
        %v1871 = vpack.c.b16 %v1543, %v1539
        %v1872 = vpack.c.b16 %v1544, %v1540
        %v1873 = vpack.c.b16 %v1545, %v1541
        %v1874 = vpack.c.b16 %v1550, %v1546
        %v1875 = vpack.c.b16 %v1551, %v1547
        %v1876 = vpack.c.b16 %v1552, %v1548
        %v1877 = vpack.c.b16 %v1553, %v1549
        %v1878 = vpack.c.b16 %v1558, %v1554
        %v1879 = vpack.c.b16 %v1559, %v1555
        %v1880 = vpack.c.b16 %v1560, %v1556
        %v1881 = vpack.c.b16 %v1561, %v1557
        %v1882 = vpack.c.b16 %v1566, %v1562
        %v1883 = vpack.c.b16 %v1567, %v1563
        %v1884 = vpack.c.b16 %v1568, %v1564
        %v1885 = vpack.c.b16 %v1569, %v1565
        %v1886 = vpack.c.b16 %v1574, %v1570
        %v1887 = vpack.c.b16 %v1575, %v1571
        %v1888 = vpack.c.b16 %v1576, %v1572
        %v1889 = vpack.c.b16 %v1577, %v1573
        %v1890 = vpack.c.b16 %v1582, %v1578
        %v1891 = vpack.c.b16 %v1583, %v1579
        %v1892 = vpack.c.b16 %v1584, %v1580
        %v1893 = vpack.c.b16 %v1585, %v1581
        %v1894 = vpack.c.b16 %v1590, %v1586
        %v1895 = vpack.c.b16 %v1591, %v1587
        %v1896 = vpack.c.b16 %v1592, %v1588
        %v1897 = vpack.c.b16 %v1593, %v1589
        %v1898 = vpack.c.b16 %v1598, %v1594
        %v1899 = vpack.c.b16 %v1599, %v1595
        %v1900 = vpack.c.b16 %v1600, %v1596
        %v1901 = vpack.c.b16 %v1601, %v1597
        %v1902 = vpack.c.b16 %v1606, %v1602
        %v1903 = vpack.c.b16 %v1607, %v1603
        %v1904 = vpack.c.b16 %v1608, %v1604
        %v1905 = vpack.c.b16 %v1609, %v1605
        %v1906 = vpack.c.b16 %v1614, %v1610
        %v1907 = vpack.c.b16 %v1615, %v1611
        %v1908 = vpack.c.b16 %v1616, %v1612
        %v1909 = vpack.c.b16 %v1617, %v1613
        %v1910 = vpack.c.b16 %v1622, %v1618
        %v1911 = vpack.c.b16 %v1623, %v1619
        %v1912 = vpack.c.b16 %v1624, %v1620
        %v1913 = vpack.c.b16 %v1625, %v1621
        %v1914 = vpack.c.b16 %v1630, %v1626
        %v1915 = vpack.c.b16 %v1631, %v1627
        %v1916 = vpack.c.b16 %v1632, %v1628
        %v1917 = vpack.c.b16 %v1633, %v1629
        %v1918 = vpack.c.b16 %v1638, %v1634
        %v1919 = vpack.c.b16 %v1639, %v1635
        %v1920 = vpack.c.b16 %v1640, %v1636
        %v1921 = vpack.c.b16 %v1641, %v1637
        %v1922 = vpack.c.b16 %v1646, %v1642
        %v1923 = vpack.c.b16 %v1647, %v1643
        %v1924 = vpack.c.b16 %v1648, %v1644
        %v1925 = vpack.c.b16 %v1649, %v1645
        %v1926 = vpack.c.b16 %v1654, %v1650
        %v1927 = vpack.c.b16 %v1655, %v1651
        %v1928 = vpack.c.b16 %v1656, %v1652
        %v1929 = vpack.c.b16 %v1657, %v1653
        %v1930 = vpack.c.b16 %v1662, %v1658
        %v1931 = vpack.c.b16 %v1663, %v1659
        %v1932 = vpack.c.b16 %v1664, %v1660
        %v1933 = vpack.c.b16 %v1665, %v1661
        %v1934 = vpack.c.b16 %v1670, %v1666
        %v1935 = vpack.c.b16 %v1671, %v1667
        %v1936 = vpack.c.b16 %v1672, %v1668
        %v1937 = vpack.c.b16 %v1673, %v1669
        %v1938 = vpack.c.b16 %v1678, %v1674
        %v1939 = vpack.c.b16 %v1679, %v1675
        %v1940 = vpack.c.b16 %v1680, %v1676
        %v1941 = vpack.c.b16 %v1681, %v1677
        %v1942 = vpack.c.b16 %v1686, %v1682
        %v1943 = vpack.c.b16 %v1687, %v1683
        %v1944 = vpack.c.b16 %v1688, %v1684
        %v1945 = vpack.c.b16 %v1689, %v1685
        %2202 = vmatprep.subr.bf16.mxu0 %v1719
        %2203 = vmatpush1.bf16.msra.mxu0 %v1718
        %2204 = vmatprep.subr.bf16.mxu0 %v1715
        %2205 = vmatpush1.bf16.msra.mxu0 %v1714
        %2206 = vmatprep.subr.bf16.mxu0 %v1711
        %2207 = vmatpush1.bf16.msra.mxu0 %v1710
        %2208 = vmatprep.subr.bf16.mxu0 %v1707
        %2209 = vmatpush1.bf16.msra.mxu0 %v1706
        %2210 = vmatprep.subr.bf16.mxu0 %v1703
        %2211 = vmatpush1.bf16.msra.mxu0 %v1702
        %2212 = vmatprep.subr.bf16.mxu0 %v1699
        %2213 = vmatpush1.bf16.msra.mxu0 %v1698
        %2214 = vmatprep.subr.bf16.mxu0 %v1695
        %2215 = vmatpush1.bf16.msra.mxu0 %v1694
        %2216 = vmatprep.subr.bf16.mxu0 %v1691
        %2217 = vmatpush1.bf16.msra.mxu0 %v1690
        %2218 = vmatprep.subr.bf16.mxu0 %v1751
        %2219 = vmatpush2.bf16.msra.mxu0 %v1750
        %2220 = vmatprep.subr.bf16.mxu0 %v1747
        %2221 = vmatpush2.bf16.msra.mxu0 %v1746
        %2222 = vmatprep.subr.bf16.mxu0 %v1743
        %2223 = vmatpush2.bf16.msra.mxu0 %v1742
        %2224 = vmatprep.subr.bf16.mxu0 %v1739
        %2225 = vmatpush2.bf16.msra.mxu0 %v1738
        %2226 = vmatprep.subr.bf16.mxu0 %v1735
        %2227 = vmatpush2.bf16.msra.mxu0 %v1734
        %2228 = vmatprep.subr.bf16.mxu0 %v1731
        %2229 = vmatpush2.bf16.msra.mxu0 %v1730
        %2230 = vmatprep.subr.bf16.mxu0 %v1727
        %2231 = vmatpush2.bf16.msra.mxu0 %v1726
        %2232 = vmatprep.subr.bf16.mxu0 %v1723
        %2233 = vmatpush2.bf16.msra.mxu0 %v1722
        %2234 = vmatprep.mubr.bf16.mxu0 %v637
        %2235 = vmatmul.mubr.bf16.gmra.mxu0 %v636
        %v2236 = vpop.f32.mrf.mxu0
        %v2237 = vadd.f32 %v905, %v2236
        %v2238 = vpop.f32.mrf.mxu0
        %v2239 = vadd.f32 %v909, %v2238
        %v2240 = vpop.f32.mrf.mxu0
        %v2241 = vpop.f32.mrf.mxu0
        %2242 = vdwg.mxu0
        %2243 = vmatprep.subr.bf16.mxu0 %v1783
        %2244 = vmatpush1.bf16.msra.mxu0 %v1782
        %2245 = vmatprep.subr.bf16.mxu0 %v1779
        %2246 = vmatpush1.bf16.msra.mxu0 %v1778
        %2247 = vmatprep.subr.bf16.mxu0 %v1775
        %2248 = vmatpush1.bf16.msra.mxu0 %v1774
        %2249 = vmatprep.subr.bf16.mxu0 %v1771
        %2250 = vmatpush1.bf16.msra.mxu0 %v1770
        %2251 = vmatprep.subr.bf16.mxu0 %v1767
        %2252 = vmatpush1.bf16.msra.mxu0 %v1766
        %2253 = vmatprep.subr.bf16.mxu0 %v1763
        %2254 = vmatpush1.bf16.msra.mxu0 %v1762
        %2255 = vmatprep.subr.bf16.mxu0 %v1759
        %2256 = vmatpush1.bf16.msra.mxu0 %v1758
        %2257 = vmatprep.subr.bf16.mxu0 %v1755
        %2258 = vmatpush1.bf16.msra.mxu0 %v1754
        %2259 = vmatprep.subr.bf16.mxu0 %v1815
        %2260 = vmatpush2.bf16.msra.mxu0 %v1814
        %2261 = vmatprep.subr.bf16.mxu0 %v1811
        %2262 = vmatpush2.bf16.msra.mxu0 %v1810
        %2263 = vmatprep.subr.bf16.mxu0 %v1807
        %2264 = vmatpush2.bf16.msra.mxu0 %v1806
        %2265 = vmatprep.subr.bf16.mxu0 %v1803
        %2266 = vmatpush2.bf16.msra.mxu0 %v1802
        %2267 = vmatprep.subr.bf16.mxu0 %v1799
        %2268 = vmatpush2.bf16.msra.mxu0 %v1798
        %2269 = vmatprep.subr.bf16.mxu0 %v1795
        %2270 = vmatpush2.bf16.msra.mxu0 %v1794
        %2271 = vmatprep.subr.bf16.mxu0 %v1791
        %2272 = vmatpush2.bf16.msra.mxu0 %v1790
        %2273 = vmatprep.subr.bf16.mxu0 %v1787
        %2274 = vmatpush2.bf16.msra.mxu0 %v1786
        %2275 = vmatprep.mubr.bf16.mxu0 %v639
        %2276 = vmatmul.mubr.bf16.gmra.mxu0 %v638
        %v2277 = vpop.f32.mrf.mxu0
        %v2278 = vadd.f32 %v2237, %v2277
        %v2279 = vpop.f32.mrf.mxu0
        %v2280 = vadd.f32 %v2239, %v2279
        %v2281 = vpop.f32.mrf.mxu0
        %v2282 = vpop.f32.mrf.mxu0
        %2283 = vdwg.mxu0
        %2284 = vmatprep.subr.bf16.mxu0 %v1847
        %2285 = vmatpush1.bf16.msra.mxu0 %v1846
        %2286 = vmatprep.subr.bf16.mxu0 %v1843
        %2287 = vmatpush1.bf16.msra.mxu0 %v1842
        %2288 = vmatprep.subr.bf16.mxu0 %v1839
        %2289 = vmatpush1.bf16.msra.mxu0 %v1838
        %2290 = vmatprep.subr.bf16.mxu0 %v1835
        %2291 = vmatpush1.bf16.msra.mxu0 %v1834
        %2292 = vmatprep.subr.bf16.mxu0 %v1831
        %2293 = vmatpush1.bf16.msra.mxu0 %v1830
        %2294 = vmatprep.subr.bf16.mxu0 %v1827
        %2295 = vmatpush1.bf16.msra.mxu0 %v1826
        %2296 = vmatprep.subr.bf16.mxu0 %v1823
        %2297 = vmatpush1.bf16.msra.mxu0 %v1822
        %2298 = vmatprep.subr.bf16.mxu0 %v1819
        %2299 = vmatpush1.bf16.msra.mxu0 %v1818
        %2300 = vmatprep.subr.bf16.mxu0 %v1879
        %2301 = vmatpush2.bf16.msra.mxu0 %v1878
        %2302 = vmatprep.subr.bf16.mxu0 %v1875
        %2303 = vmatpush2.bf16.msra.mxu0 %v1874
        %2304 = vmatprep.subr.bf16.mxu0 %v1871
        %2305 = vmatpush2.bf16.msra.mxu0 %v1870
        %2306 = vmatprep.subr.bf16.mxu0 %v1867
        %2307 = vmatpush2.bf16.msra.mxu0 %v1866
        %2308 = vmatprep.subr.bf16.mxu0 %v1863
        %2309 = vmatpush2.bf16.msra.mxu0 %v1862
        %2310 = vmatprep.subr.bf16.mxu0 %v1859
        %2311 = vmatpush2.bf16.msra.mxu0 %v1858
        %2312 = vmatprep.subr.bf16.mxu0 %v1855
        %2313 = vmatpush2.bf16.msra.mxu0 %v1854
        %2314 = vmatprep.subr.bf16.mxu0 %v1851
        %2315 = vmatpush2.bf16.msra.mxu0 %v1850
        %2316 = vmatprep.mubr.bf16.mxu0 %v641
        %2317 = vmatmul.mubr.bf16.gmra.mxu0 %v640
        %v2318 = vpop.f32.mrf.mxu0
        %v2319 = vadd.f32 %v2278, %v2318
        %v2320 = vpop.f32.mrf.mxu0
        %v2321 = vadd.f32 %v2280, %v2320
        %v2322 = vpop.f32.mrf.mxu0
        %v2323 = vpop.f32.mrf.mxu0
        %2324 = vdwg.mxu0
        %2325 = vmatprep.subr.bf16.mxu0 %v1911
        %2326 = vmatpush1.bf16.msra.mxu0 %v1910
        %2327 = vmatprep.subr.bf16.mxu0 %v1907
        %2328 = vmatpush1.bf16.msra.mxu0 %v1906
        %2329 = vmatprep.subr.bf16.mxu0 %v1903
        %2330 = vmatpush1.bf16.msra.mxu0 %v1902
        %2331 = vmatprep.subr.bf16.mxu0 %v1899
        %2332 = vmatpush1.bf16.msra.mxu0 %v1898
        %2333 = vmatprep.subr.bf16.mxu0 %v1895
        %2334 = vmatpush1.bf16.msra.mxu0 %v1894
        %2335 = vmatprep.subr.bf16.mxu0 %v1891
        %2336 = vmatpush1.bf16.msra.mxu0 %v1890
        %2337 = vmatprep.subr.bf16.mxu0 %v1887
        %2338 = vmatpush1.bf16.msra.mxu0 %v1886
        %2339 = vmatprep.subr.bf16.mxu0 %v1883
        %2340 = vmatpush1.bf16.msra.mxu0 %v1882
        %2341 = vmatprep.subr.bf16.mxu0 %v1943
        %2342 = vmatpush2.bf16.msra.mxu0 %v1942
        %2343 = vmatprep.subr.bf16.mxu0 %v1939
        %2344 = vmatpush2.bf16.msra.mxu0 %v1938
        %2345 = vmatprep.subr.bf16.mxu0 %v1935
        %2346 = vmatpush2.bf16.msra.mxu0 %v1934
        %2347 = vmatprep.subr.bf16.mxu0 %v1931
        %2348 = vmatpush2.bf16.msra.mxu0 %v1930
        %2349 = vmatprep.subr.bf16.mxu0 %v1927
        %2350 = vmatpush2.bf16.msra.mxu0 %v1926
        %2351 = vmatprep.subr.bf16.mxu0 %v1923
        %2352 = vmatpush2.bf16.msra.mxu0 %v1922
        %2353 = vmatprep.subr.bf16.mxu0 %v1919
        %2354 = vmatpush2.bf16.msra.mxu0 %v1918
        %2355 = vmatprep.subr.bf16.mxu0 %v1915
        %2356 = vmatpush2.bf16.msra.mxu0 %v1914
        %2357 = vmatprep.mubr.bf16.mxu0 %v643
        %2358 = vmatmul.mubr.bf16.gmra.mxu0 %v642
        %v2359 = vpop.f32.mrf.mxu0
        %v2360 = vadd.f32 %v2319, %v2359
        %v2361 = vpop.f32.mrf.mxu0
        %v2362 = vadd.f32 %v2321, %v2361
        %v2363 = vpop.f32.mrf.mxu0
        %v2364 = vpop.f32.mrf.mxu0
        %2365 = vdwg.mxu0
        %2366 = vmatprep.subr.bf16.mxu0 %v1721
        %2367 = vmatpush1.bf16.msra.mxu0 %v1720
        %2368 = vmatprep.subr.bf16.mxu0 %v1717
        %2369 = vmatpush1.bf16.msra.mxu0 %v1716
        %2370 = vmatprep.subr.bf16.mxu0 %v1713
        %2371 = vmatpush1.bf16.msra.mxu0 %v1712
        %2372 = vmatprep.subr.bf16.mxu0 %v1709
        %2373 = vmatpush1.bf16.msra.mxu0 %v1708
        %2374 = vmatprep.subr.bf16.mxu0 %v1705
        %2375 = vmatpush1.bf16.msra.mxu0 %v1704
        %2376 = vmatprep.subr.bf16.mxu0 %v1701
        %2377 = vmatpush1.bf16.msra.mxu0 %v1700
        %2378 = vmatprep.subr.bf16.mxu0 %v1697
        %2379 = vmatpush1.bf16.msra.mxu0 %v1696
        %2380 = vmatprep.subr.bf16.mxu0 %v1693
        %2381 = vmatpush1.bf16.msra.mxu0 %v1692
        %2382 = vmatprep.subr.bf16.mxu0 %v1753
        %2383 = vmatpush2.bf16.msra.mxu0 %v1752
        %2384 = vmatprep.subr.bf16.mxu0 %v1749
        %2385 = vmatpush2.bf16.msra.mxu0 %v1748
        %2386 = vmatprep.subr.bf16.mxu0 %v1745
        %2387 = vmatpush2.bf16.msra.mxu0 %v1744
        %2388 = vmatprep.subr.bf16.mxu0 %v1741
        %2389 = vmatpush2.bf16.msra.mxu0 %v1740
        %2390 = vmatprep.subr.bf16.mxu0 %v1737
        %2391 = vmatpush2.bf16.msra.mxu0 %v1736
        %2392 = vmatprep.subr.bf16.mxu0 %v1733
        %2393 = vmatpush2.bf16.msra.mxu0 %v1732
        %2394 = vmatprep.subr.bf16.mxu0 %v1729
        %2395 = vmatpush2.bf16.msra.mxu0 %v1728
        %2396 = vmatprep.subr.bf16.mxu0 %v1725
        %2397 = vmatpush2.bf16.msra.mxu0 %v1724
        %2398 = vmatprep.mubr.bf16.mxu0 %v637
        %2399 = vmatmul.mubr.bf16.gmra.mxu0 %v636
        %v2400 = vpop.f32.mrf.mxu0
        %v2401 = vadd.f32 %v913, %v2400
        %v2402 = vpop.f32.mrf.mxu0
        %v2403 = vadd.f32 %v917, %v2402
        %v2404 = vpop.f32.mrf.mxu0
        %v2405 = vpop.f32.mrf.mxu0
        %2406 = vdwg.mxu0
        %2407 = vmatprep.subr.bf16.mxu0 %v1785
        %2408 = vmatpush1.bf16.msra.mxu0 %v1784
        %2409 = vmatprep.subr.bf16.mxu0 %v1781
        %2410 = vmatpush1.bf16.msra.mxu0 %v1780
        %2411 = vmatprep.subr.bf16.mxu0 %v1777
        %2412 = vmatpush1.bf16.msra.mxu0 %v1776
        %2413 = vmatprep.subr.bf16.mxu0 %v1773
        %2414 = vmatpush1.bf16.msra.mxu0 %v1772
        %2415 = vmatprep.subr.bf16.mxu0 %v1769
        %2416 = vmatpush1.bf16.msra.mxu0 %v1768
        %2417 = vmatprep.subr.bf16.mxu0 %v1765
        %2418 = vmatpush1.bf16.msra.mxu0 %v1764
        %2419 = vmatprep.subr.bf16.mxu0 %v1761
        %2420 = vmatpush1.bf16.msra.mxu0 %v1760
        %2421 = vmatprep.subr.bf16.mxu0 %v1757
        %2422 = vmatpush1.bf16.msra.mxu0 %v1756
        %2423 = vmatprep.subr.bf16.mxu0 %v1817
        %2424 = vmatpush2.bf16.msra.mxu0 %v1816
        %2425 = vmatprep.subr.bf16.mxu0 %v1813
        %2426 = vmatpush2.bf16.msra.mxu0 %v1812
        %2427 = vmatprep.subr.bf16.mxu0 %v1809
        %2428 = vmatpush2.bf16.msra.mxu0 %v1808
        %2429 = vmatprep.subr.bf16.mxu0 %v1805
        %2430 = vmatpush2.bf16.msra.mxu0 %v1804
        %2431 = vmatprep.subr.bf16.mxu0 %v1801
        %2432 = vmatpush2.bf16.msra.mxu0 %v1800
        %2433 = vmatprep.subr.bf16.mxu0 %v1797
        %2434 = vmatpush2.bf16.msra.mxu0 %v1796
        %2435 = vmatprep.subr.bf16.mxu0 %v1793
        %2436 = vmatpush2.bf16.msra.mxu0 %v1792
        %2437 = vmatprep.subr.bf16.mxu0 %v1789
        %2438 = vmatpush2.bf16.msra.mxu0 %v1788
        %2439 = vmatprep.mubr.bf16.mxu0 %v639
        %2440 = vmatmul.mubr.bf16.gmra.mxu0 %v638
        %v2441 = vpop.f32.mrf.mxu0
        %v2442 = vadd.f32 %v2401, %v2441
        %v2443 = vpop.f32.mrf.mxu0
        %v2444 = vadd.f32 %v2403, %v2443
        %v2445 = vpop.f32.mrf.mxu0
        %v2446 = vpop.f32.mrf.mxu0
        %2447 = vdwg.mxu0
        %2448 = vmatprep.subr.bf16.mxu0 %v1849
        %2449 = vmatpush1.bf16.msra.mxu0 %v1848
        %2450 = vmatprep.subr.bf16.mxu0 %v1845
        %2451 = vmatpush1.bf16.msra.mxu0 %v1844
        %2452 = vmatprep.subr.bf16.mxu0 %v1841
        %2453 = vmatpush1.bf16.msra.mxu0 %v1840
        %2454 = vmatprep.subr.bf16.mxu0 %v1837
        %2455 = vmatpush1.bf16.msra.mxu0 %v1836
        %2456 = vmatprep.subr.bf16.mxu0 %v1833
        %2457 = vmatpush1.bf16.msra.mxu0 %v1832
        %2458 = vmatprep.subr.bf16.mxu0 %v1829
        %2459 = vmatpush1.bf16.msra.mxu0 %v1828
        %2460 = vmatprep.subr.bf16.mxu0 %v1825
        %2461 = vmatpush1.bf16.msra.mxu0 %v1824
        %2462 = vmatprep.subr.bf16.mxu0 %v1821
        %2463 = vmatpush1.bf16.msra.mxu0 %v1820
        %2464 = vmatprep.subr.bf16.mxu0 %v1881
        %2465 = vmatpush2.bf16.msra.mxu0 %v1880
        %2466 = vmatprep.subr.bf16.mxu0 %v1877
        %2467 = vmatpush2.bf16.msra.mxu0 %v1876
        %2468 = vmatprep.subr.bf16.mxu0 %v1873
        %2469 = vmatpush2.bf16.msra.mxu0 %v1872
        %2470 = vmatprep.subr.bf16.mxu0 %v1869
        %2471 = vmatpush2.bf16.msra.mxu0 %v1868
        %2472 = vmatprep.subr.bf16.mxu0 %v1865
        %2473 = vmatpush2.bf16.msra.mxu0 %v1864
        %2474 = vmatprep.subr.bf16.mxu0 %v1861
        %2475 = vmatpush2.bf16.msra.mxu0 %v1860
        %2476 = vmatprep.subr.bf16.mxu0 %v1857
        %2477 = vmatpush2.bf16.msra.mxu0 %v1856
        %2478 = vmatprep.subr.bf16.mxu0 %v1853
        %2479 = vmatpush2.bf16.msra.mxu0 %v1852
        %2480 = vmatprep.mubr.bf16.mxu0 %v641
        %2481 = vmatmul.mubr.bf16.gmra.mxu0 %v640
        %v2482 = vpop.f32.mrf.mxu0
        %v2483 = vadd.f32 %v2442, %v2482
        %v2484 = vpop.f32.mrf.mxu0
        %v2485 = vadd.f32 %v2444, %v2484
        %v2486 = vpop.f32.mrf.mxu0
        %v2487 = vpop.f32.mrf.mxu0
        %2488 = vdwg.mxu0
        %2489 = vmatprep.subr.bf16.mxu0 %v1913
        %2490 = vmatpush1.bf16.msra.mxu0 %v1912
        %2491 = vmatprep.subr.bf16.mxu0 %v1909
        %2492 = vmatpush1.bf16.msra.mxu0 %v1908
        %2493 = vmatprep.subr.bf16.mxu0 %v1905
        %2494 = vmatpush1.bf16.msra.mxu0 %v1904
        %2495 = vmatprep.subr.bf16.mxu0 %v1901
        %2496 = vmatpush1.bf16.msra.mxu0 %v1900
        %2497 = vmatprep.subr.bf16.mxu0 %v1897
        %2498 = vmatpush1.bf16.msra.mxu0 %v1896
        %2499 = vmatprep.subr.bf16.mxu0 %v1893
        %2500 = vmatpush1.bf16.msra.mxu0 %v1892
        %2501 = vmatprep.subr.bf16.mxu0 %v1889
        %2502 = vmatpush1.bf16.msra.mxu0 %v1888
        %2503 = vmatprep.subr.bf16.mxu0 %v1885
        %2504 = vmatpush1.bf16.msra.mxu0 %v1884
        %2505 = vmatprep.subr.bf16.mxu0 %v1945
        %2506 = vmatpush2.bf16.msra.mxu0 %v1944
        %2507 = vmatprep.subr.bf16.mxu0 %v1941
        %2508 = vmatpush2.bf16.msra.mxu0 %v1940
        %2509 = vmatprep.subr.bf16.mxu0 %v1937
        %2510 = vmatpush2.bf16.msra.mxu0 %v1936
        %2511 = vmatprep.subr.bf16.mxu0 %v1933
        %2512 = vmatpush2.bf16.msra.mxu0 %v1932
        %2513 = vmatprep.subr.bf16.mxu0 %v1929
        %2514 = vmatpush2.bf16.msra.mxu0 %v1928
        %2515 = vmatprep.subr.bf16.mxu0 %v1925
        %2516 = vmatpush2.bf16.msra.mxu0 %v1924
        %2517 = vmatprep.subr.bf16.mxu0 %v1921
        %2518 = vmatpush2.bf16.msra.mxu0 %v1920
        %2519 = vmatprep.subr.bf16.mxu0 %v1917
        %2520 = vmatpush2.bf16.msra.mxu0 %v1916
        %2521 = vmatprep.mubr.bf16.mxu0 %v643
        %2522 = vmatmul.mubr.bf16.gmra.mxu0 %v642
        %v2523 = vpop.f32.mrf.mxu0
        %v2524 = vadd.f32 %v2483, %v2523
        %v2525 = vpop.f32.mrf.mxu0
        %v2526 = vadd.f32 %v2485, %v2525
        %v2527 = vpop.f32.mrf.mxu0
        %v2528 = vpop.f32.mrf.mxu0
        %2529 = vdwg.mxu0
        %v2530 = vtanh.pop %v2360
        %v2531 = vtanh.pop %v2362
        %v2532 = vtanh.pop %v2524
        %v2533 = vtanh.pop %v2526
        %2534 = vst [vmem:[%s317] sm:$0xff] %v2530
        %2535 = vst [vmem:[%s317 + $0x8] sm:$0xff] %v2531
        %2536 = vst [vmem:[%s317 + $0x10] sm:$0xff] %v2532
        %2537 = vst [vmem:[%s317 + $0x18] sm:$0xff] %v2533
        %s2538 = sand.u32 %s147, 1
        %s2539 = scalar_lea.sflag [#allocation4], %s2538
        %s2540 = sand.u32 %s147, 1
        %s2541 = smul.addr %s2540, 32
        %s2542 = scalar_lea.vmem [#allocation11], %s2541
        // Predicated region
        $region61: #{tpu_custom_call.1} parent=39 // pred_check
          %p2543 = pneg %p157
        $region62: #{tpu_custom_call.1} parent=39 // pred_check_branch
          %2545 = sbr.rel (%p2543) target = $region64
        $region63: #{tpu_custom_call.1} parent=39 // pred_region
          %s2546 = smul.u32 4, %s24
          %s2548 = ssub.s32 512, 512
          %2549 = vsyncadd %s2539, %s2548
          %s2550 = smul.addr %s2546, 128
          %s2551 = scalar_lea.hbm %s5, %s2550
          %s2553 = sshll.u32 %s2542, 4
          %s2554 = int_to_ptr.vmem [resolvable:$true] %s2553
          %2556 = dma.vmem_to_hbm [thread:$0]  %s2554, 512, %s2551, %s2539
        $region64: #{tpu_custom_call.1} parent=39 // pred_fallthru
          _
      $region40: #{tpu_custom_call.1} parent=5 // pred_fallthru
        _
      %p2557 = scmp.le.s32.totalorder 2, %s19
      // Predicated region
      $region65: #{tpu_custom_call.1} parent=5 // pred_check
        %p2558 = pneg %p2557
      $region66: #{tpu_custom_call.1} parent=5 // pred_check_branch
        %2560 = sbr.rel (%p2558) target = $region68
      $region67: #{tpu_custom_call.1} parent=5 // pred_region
        %s2561 = ssub.s32 %s19, 2
        // Predicated region
        $region69: #{tpu_custom_call.1} parent=67 // pred_check
          %p2562 = pneg %p163
        $region70: #{tpu_custom_call.1} parent=67 // pred_check_branch
          %2564 = sbr.rel (%p2562) target = $region72
        $region71: #{tpu_custom_call.1} parent=67 // pred_region
          %s2565 = sand.u32 %s148, 1
          %s2566 = scalar_lea.sflag [#allocation4], %s2565
          %s2567 = sand.u32 %s148, 1
          %s2568 = smul.addr %s2567, 32
          %s2569 = scalar_lea.vmem [#allocation11], %s2568
          %2570 = dma.done %s2566, 512
        $region72: #{tpu_custom_call.1} parent=67 // pred_fallthru
          _
      $region68: #{tpu_custom_call.1} parent=5 // pred_fallthru
        _
    $region6: #{tpu_custom_call.1} parent=1 // loop_footer
      %s23 = sadd.s32 1, %s19
    $region7: #{tpu_custom_call.1} parent=1 // loop_footer_branch
      %18 = sbr.rel target = $region3
    $region8: #{tpu_custom_call.1} parent=1 // loop_exit
      _
    %2571 = vsyncpa [#allocation3], 1
    %s2572 = scalar_lea.sflag [#allocation3], 1
    %2573 = vsyncpa %s2572, 1
    %2574 = vsyncpa [#allocation6], 1
    %2575 = vsyncpa [#allocation9], 1
    %s2576 = scalar_lea.sflag [#allocation9], 1
    %2577 = vsyncpa %s2576, 1
    %2578 = vsyncpa [#allocation4], 1
    %s2579 = scalar_lea.sflag [#allocation4], 1
    %2580 = vsyncpa %s2579, 1

</llo_original>
